<compile_context>
chip_gen: v7x
topology: tpu7x:2x2x1
jax: 0.10.0
libtpu: 0.0.40
codegen_flags: <defaults>
</compile_context>

<pallas_src>
import functools

import jax
import jax.numpy as jnp
from jax.experimental import pallas as pl
from jax.experimental.pallas import tpu as pltpu


def _pick_block(total: int, target: int, align: int) -> int:
    """Largest multiple of `align` <= target that divides `total`; else full `total`."""
    if total <= target:
        return total
    blk = (target // align) * align
    while blk >= align:
        if total % blk == 0:
            return blk
        blk -= align
    return total


def _conv3x3_residual_kernel(w_ref, xcol_ref, xres_ref, o_ref, *, precision):
    # w_ref:    (C_out, 9*C_in)   flattened 3x3 conv weight (tap-major rows)
    # xcol_ref: (9*C_in, hw_blk)  im2col slab, lane-dense (HW on lanes)
    # xres_ref: (C_out, hw_blk)   residual input slab
    # o_ref:    (C_out, hw_blk)
    y = jnp.dot(w_ref[...], xcol_ref[...],
                preferred_element_type=jnp.float32, precision=precision)
    o_ref[...] = (xres_ref[...].astype(jnp.float32) + y).astype(o_ref.dtype)


def tsf_forward(x, conv_weight, *, compute_dtype=jnp.float32, hw_block_target=2048):
    """TSF forward: x + conv3x3(TransformerGroup(x)).

    x: (B, C, H, W); conv_weight: (C, C, 3, 3) (Conv2d, padding=1, bias=False).
    """
    B, C, H, W = x.shape
    C_out, C_in, kh, kw = conv_weight.shape
    assert (C_out, C_in, kh, kw) == (C, C, 3, 3), (conv_weight.shape, x.shape)
    HW = H * W
    cdt = jnp.dtype(compute_dtype)

    # TODO(synk): TransformerGroup / TransformerBlock definition is not provided
    # in the spec -> identity pass-through.
    x_tg = x

    # Layout plumbing in the wrapper: zero-pad + 9-tap im2col so the conv becomes
    # a single lane-dense MXU matmul inside the kernel.
    xp = jnp.pad(x_tg, ((0, 0), (0, 0), (1, 1), (1, 1)))
    taps = [xp[:, :, dh:dh + H, dw:dw + W] for dh in range(3) for dw in range(3)]
    xcol = jnp.concatenate(taps, axis=1).reshape(B, 9 * C, HW).astype(cdt)
    # w_flat[co, (dh*3+dw)*C_in + ci] = weight[co, ci, dh, dw]
    w_flat = jnp.transpose(conv_weight, (0, 2, 3, 1)).reshape(C_out, 9 * C_in).astype(cdt)
    xres = x.reshape(B, C, HW)

    precision = (jax.lax.Precision.HIGHEST if cdt == jnp.dtype(jnp.float32)
                 else jax.lax.Precision.DEFAULT)

    hw_blk = _pick_block(HW, hw_block_target, 128)
    grid = (B, HW // hw_blk)

    # VMEM budget: double-buffered inputs/outputs; tiny at these shapes but keep
    # the explicit limit so large H*W configurations stay under the v7x ceiling.
    isz = cdt.itemsize
    osz = jnp.dtype(x.dtype).itemsize
    need = 2 * (isz * (C_out * 9 * C_in + 9 * C_in * hw_blk)
                + osz * 2 * C_out * hw_blk)
    vmem_limit = int(min(64 * 2 ** 20, max(32 * 2 ** 20, 2 * need)))

    cost = pl.CostEstimate(
        flops=2 * B * C_out * 9 * C_in * HW + B * C_out * HW,
        transcendentals=0,
        bytes_accessed=(isz * (B * 9 * C_in * HW + C_out * 9 * C_in)
                        + osz * 2 * B * C_out * HW),
    )

    out_flat = pl.pallas_call(
        functools.partial(_conv3x3_residual_kernel, precision=precision),
        out_shape=jax.ShapeDtypeStruct((B, C_out, HW), x.dtype),
        grid=grid,
        in_specs=[
            pl.BlockSpec((C_out, 9 * C_in), lambda b, t: (0, 0)),
            pl.BlockSpec((None, 9 * C_in, hw_blk), lambda b, t: (b, 0, t)),
            pl.BlockSpec((None, C_out, hw_blk), lambda b, t: (b, 0, t)),
        ],
        out_specs=pl.BlockSpec((None, C_out, hw_blk), lambda b, t: (b, 0, t)),
        compiler_params=pltpu.CompilerParams(
            dimension_semantics=("parallel", "parallel"),
            vmem_limit_bytes=vmem_limit),
        cost_estimate=cost,
    )(w_flat, xcol, xres)

    return out_flat.reshape(B, C_out, H, W)


def _reference(x, conv_weight):
    """Plain-JAX reference: x + conv3x3(x) (TransformerGroup treated as identity)."""
    P = jax.lax.Precision.HIGHEST
    y = jax.lax.conv_general_dilated(
        x, conv_weight, window_strides=(1, 1), padding=((1, 1), (1, 1)),
        dimension_numbers=("NCHW", "OIHW", "NCHW"), precision=P)
    return x + y


if __name__ == "__main__":
    key = jax.random.PRNGKey(0)
    B, C, H, W = 2, 32, 16, 16   # module default in_channels=32

    kx, kw = jax.random.split(key)
    x = jax.random.normal(kx, (B, C, H, W), dtype=jnp.float32)
    # Deterministic 3x3 conv weight (bias=False): (C_out, C_in, 3, 3)
    weight = jax.random.normal(kw, (C, C, 3, 3), dtype=jnp.float32) * 0.1

    ref = _reference(x, weight)

    out = jax.block_until_ready(tsf_forward(x, weight))
    assert out.shape == (B, C, H, W), out.shape
    assert jnp.allclose(out, ref, atol=1e-4, rtol=1e-4), "mismatch vs reference"

    print("KERNEL_OK")
</pallas_src>

<mosaic_0001>
module attributes {stable_mosaic.version = 11 : i64} {
  func.func @_conv3x3_residual_kernel(%arg0: i32, %arg1: i32, %arg2: memref<32x288xf32, #tpu.memory_space<vmem>>, %arg3: memref<1x288x256xf32, #tpu.memory_space<vmem>>, %arg4: memref<1x32x256xf32, #tpu.memory_space<vmem>>, %arg5: memref<1x32x256xf32, #tpu.memory_space<vmem>>) attributes {dimension_semantics = [#tpu.dimension_semantics<parallel>, #tpu.dimension_semantics<parallel>], iteration_bounds = array<i64: 2, 1>, scalar_prefetch = 0 : i64, scratch_operands = 0 : i64, tpu.core_type = #tpu.core_type<tc>, window_params = [{pipeline_mode = #tpu.pipeline_mode<synchronous>, transform_indices = @transform_0, window_bounds = array<i64: 32, 288>}, {transform_indices = @transform_1, window_bounds = array<i64: 1, 288, 256>}, {transform_indices = @transform_2, window_bounds = array<i64: 1, 32, 256>}, {transform_indices = @transform_3, window_bounds = array<i64: 1, 32, 256>}]} {
    %c0 = arith.constant 0 : index
    %c0_0 = arith.constant 0 : index
    %0 = vector.load %arg2[%c0, %c0_0] : memref<32x288xf32, #tpu.memory_space<vmem>>, vector<32x288xf32>
    %c0_1 = arith.constant 0 : index
    %c0_2 = arith.constant 0 : index
    %c0_3 = arith.constant 0 : index
    %1 = vector.load %arg3[%c0_1, %c0_2, %c0_3] : memref<1x288x256xf32, #tpu.memory_space<vmem>>, vector<1x288x256xf32>
    %2 = vector.shape_cast %1 : vector<1x288x256xf32> to vector<288x256xf32>
    %cst = arith.constant dense<0.000000e+00> : vector<32x256xf32>
    %3 = tpu.matmul %0, %2, %cst {dimension_numbers = #tpu.dot_dimension_numbers<[1], [0], [0], [1], [0, 0, 1, 1], [], []>, precision = #tpu.contract_precision<fp32>} : vector<32x288xf32>, vector<288x256xf32>, vector<32x256xf32> -> vector<32x256xf32>
    %c0_4 = arith.constant 0 : index
    %c0_5 = arith.constant 0 : index
    %c0_6 = arith.constant 0 : index
    %4 = vector.load %arg4[%c0_4, %c0_5, %c0_6] : memref<1x32x256xf32, #tpu.memory_space<vmem>>, vector<1x32x256xf32>
    %5 = vector.shape_cast %4 : vector<1x32x256xf32> to vector<32x256xf32>
    %6 = arith.addf %5, %3 : vector<32x256xf32>
    %c0_7 = arith.constant 0 : index
    %c0_8 = arith.constant 0 : index
    %c0_9 = arith.constant 0 : index
    %7 = vector.load %arg5[%c0_7, %c0_8, %c0_9] : memref<1x32x256xf32, #tpu.memory_space<vmem>>, vector<1x32x256xf32>
    %8 = vector.shape_cast %7 : vector<1x32x256xf32> to vector<32x256xf32>
    %9 = vector.shape_cast %6 : vector<32x256xf32> to vector<1x32x256xf32>
    tpu.vector_store %arg5[%c0_7, %c0_8, %c0_9], %9 {strides = array<i32>} : memref<1x32x256xf32, #tpu.memory_space<vmem>>, vector<1x32x256xf32>,
    return
  }
  func.func @transform_0(%arg0: i32, %arg1: i32) -> (i32, i32) {
    %c0_i32 = arith.constant 0 : i32
    %c0_i32_0 = arith.constant 0 : i32
    %c0_i32_1 = arith.constant 0 : i32
    return %c0_i32, %c0_i32_0 : i32, i32
  }
  func.func @transform_1(%arg0: i32, %arg1: i32) -> (i32, i32, i32) {
    %c0_i32 = arith.constant 0 : i32
    %c0_i32_0 = arith.constant 0 : i32
    return %arg0, %c0_i32, %arg1 : i32, i32, i32
  }
  func.func @transform_2(%arg0: i32, %arg1: i32) -> (i32, i32, i32) {
    %c0_i32 = arith.constant 0 : i32
    %c0_i32_0 = arith.constant 0 : i32
    return %arg0, %c0_i32, %arg1 : i32, i32, i32
  }
  func.func @transform_3(%arg0: i32, %arg1: i32) -> (i32, i32, i32) {
    %c0_i32 = arith.constant 0 : i32
    %c0_i32_0 = arith.constant 0 : i32
    return %arg0, %c0_i32, %arg1 : i32, i32, i32
  }
}

</mosaic_0001>

<llo_original>
// kernel: tpu_custom_call.1
$region0: #{tpu_custom_call.1}
  #allocation0 [shape = 'u32[]', space=smem, size = 0x4, offset = 0x4, fixed_abs, tag = 'smem constant byte address 0x4 - core index']
  #allocation1 [shape = 'u32[144,128]{1,0:T(1,128)}', space=vmem, size = 0x12000, scoped, tag = 'internal scratch']
  %s0 = inlined_call_operand.hbm [shape: f32[32,288], index: 0, kind: input, shape index: {}]
  %s1 = inlined_call_operand.hbm [shape: f32[2,288,256], index: 1, kind: input, shape index: {}]
  %s2 = inlined_call_operand.hbm [shape: f32[2,32,256], index: 2, kind: input, shape index: {}]
  %s3 = inlined_call_operand.hbm [shape: f32[2,32,256], index: 3, kind: output, shape index: {}]
  %s4 = sld [smem:[#allocation0]]
  $region57: #{tpu_custom_call.1} parent=0
    _
  %s6 = ssub.s32 1, %s4
  %s7 = scalar_select 0, %s6, %s4
  $region1: #{tpu_custom_call.1} parent=0
    #allocation2 [shape = 'u8[49152]{0}', space=vmem, size = 0xc000, scoped, tag = 'input window, operand 0, single buffered']
    #allocation3 [shape = 's32[2]{0}', space=sflag, size = 0x8, scoped, tag = 'scoped memory for tpu_custom_call.1']
    #allocation4 [shape = 's32[2]{0}', space=sflag, size = 0x8, scoped, tag = 'scoped memory for tpu_custom_call.1']
    #allocation5 [shape = 'u8[589824]{0}', space=vmem, size = 0x90000, scoped, tag = 'input window, operand 1']
    #allocation6 [shape = 's32[2]{0}', space=sflag, size = 0x8, scoped, tag = 'scoped memory for tpu_custom_call.1']
    #allocation7 [shape = 'u8[65536]{0}', space=vmem, size = 0x10000, scoped, tag = 'input window, operand 2']
    #allocation8 [shape = 'u8[65536]{0}', space=vmem, size = 0x10000, scoped, tag = 'output window, operand 0']
    %8 = vsyncpa [#allocation3], 0
    %9 = vsyncpa [#allocation6], 0
    %s10 = scalar_lea.sflag [#allocation6], 1
    %11 = vsyncpa %s10, 0
    %12 = vsyncpa [#allocation4], 0
    %s13 = scalar_lea.sflag [#allocation4], 1
    %14 = vsyncpa %s13, 0
    loop: start=0, step=1, limit=4
    $region2: #{tpu_custom_call.1} parent=1 // loop_pre_header
      _
    $region3: #{tpu_custom_call.1} parent=1 // loop_header
      %s16 = sphi 0, %s20
      %p17 = scmp.ge.s32.totalorder %s16, 4
      %s23 = sphi 0, %s35
      %s24 = sphi 0, %s31
      %s25 = sphi 0, %s23
      %s26 = sphi 0, %s24
      %s27 = sphi 0, %s25
      %s28 = sphi 0, %s26
      %s36 = sphi 0, %s36
      %s38 = sphi 0, %s36
      %s39 = sphi 0, %s38
      %s53 = sphi 0, %s39
      %s61 = sphi 0, %s63
      %s64 = sphi 0, %s61
      %s65 = sphi 0, %s64
      %s81 = sphi 0, %s65
      %s89 = sphi 0, %s91
      %s92 = sphi 0, %s89
      %s93 = sphi 0, %s92
      %s109 = sphi 0, %s93
      %s117 = sphi 0, %s119
      %s120 = sphi 0, %s117
      %s121 = sphi 0, %s120
      %s137 = sphi 0, %s121
    $region4: #{tpu_custom_call.1} parent=1 // loop_header_branch
      %19 = sbr.rel (%p17) target = $region8
    $region5: #{tpu_custom_call.1} parent=1 // loop_body
      %s21 = ssub.s32 %s16, 1
      %s22 = ssub.s32 %s16, 2
      %s29 = sadd.s32 1, %s24
      %p30 = scmp.ge.s32.totalorder %s29, 1
      %s31 = scalar_select %p30, 0, %s29
      %s32 = sadd.s32 1, %s23
      %s33 = scalar_select %p30, %s32, %s23
      %p34 = scmp.ge.s32.totalorder %s33, 2
      %s35 = scalar_select %p34, 0, %s33
      %s37 = sadd.s32 %s36, 1
      %p40 = scmp.eq.s32.totalorder %s16, 1
      %p41 = scmp.ne.s32.totalorder %s36, %s38
      %p42 = scmp.eq.s32.totalorder %s16, 0
      %p43 = por %p41, %p42
      %p44 = scmp.ne.s32.totalorder %s36, %s38
      %p45 = scmp.eq.s32.totalorder %s21, 1
      %p46 = por %p44, %p45
      %p47 = scmp.ne.s32.totalorder %s38, %s39
      %p48 = scmp.eq.s32.totalorder %s21, 0
      %p49 = por %p47, %p48
      %p50 = scmp.ne.s32.totalorder %s38, %s39
      %p51 = scmp.eq.s32.totalorder %s22, 1
      %p52 = por %p50, %p51
      %p54 = scmp.ne.s32.totalorder %s39, %s53
      %p55 = scmp.eq.s32.totalorder %s22, 0
      %p56 = por %p54, %p55
      %s57 = ssub.s32 %s23, %s35
      %s58 = ssub.s32 %s24, %s31
      %s59 = sor.u32 %s57, %s58
      %p60 = scmp.eq.s32.totalorder %s59, 0
      %s62 = sadd.s32 %s61, 1
      %s63 = scalar_select %p60, %s61, %s62
      %p66 = pneg %p60
      %p67 = scmp.eq.s32.totalorder %s16, 1
      %p68 = por %p66, %p67
      %p69 = scmp.ne.s32.totalorder %s61, %s64
      %p70 = scmp.eq.s32.totalorder %s16, 0
      %p71 = por %p69, %p70
      %p72 = scmp.ne.s32.totalorder %s61, %s64
      %p73 = scmp.eq.s32.totalorder %s21, 1
      %p74 = por %p72, %p73
      %p75 = scmp.ne.s32.totalorder %s64, %s65
      %p76 = scmp.eq.s32.totalorder %s21, 0
      %p77 = por %p75, %p76
      %p78 = scmp.ne.s32.totalorder %s64, %s65
      %p79 = scmp.eq.s32.totalorder %s22, 1
      %p80 = por %p78, %p79
      %p82 = scmp.ne.s32.totalorder %s65, %s81
      %p83 = scmp.eq.s32.totalorder %s22, 0
      %p84 = por %p82, %p83
      %s85 = ssub.s32 %s23, %s35
      %s86 = ssub.s32 %s24, %s31
      %s87 = sor.u32 %s85, %s86
      %p88 = scmp.eq.s32.totalorder %s87, 0
      %s90 = sadd.s32 %s89, 1
      %s91 = scalar_select %p88, %s89, %s90
      %p94 = pneg %p88
      %p95 = scmp.eq.s32.totalorder %s16, 1
      %p96 = por %p94, %p95
      %p97 = scmp.ne.s32.totalorder %s89, %s92
      %p98 = scmp.eq.s32.totalorder %s16, 0
      %p99 = por %p97, %p98
      %p100 = scmp.ne.s32.totalorder %s89, %s92
      %p101 = scmp.eq.s32.totalorder %s21, 1
      %p102 = por %p100, %p101
      %p103 = scmp.ne.s32.totalorder %s92, %s93
      %p104 = scmp.eq.s32.totalorder %s21, 0
      %p105 = por %p103, %p104
      %p106 = scmp.ne.s32.totalorder %s92, %s93
      %p107 = scmp.eq.s32.totalorder %s22, 1
      %p108 = por %p106, %p107
      %p110 = scmp.ne.s32.totalorder %s93, %s109
      %p111 = scmp.eq.s32.totalorder %s22, 0
      %p112 = por %p110, %p111
      %s113 = ssub.s32 %s23, %s35
      %s114 = ssub.s32 %s24, %s31
      %s115 = sor.u32 %s113, %s114
      %p116 = scmp.eq.s32.totalorder %s115, 0
      %s118 = sadd.s32 %s117, 1
      %s119 = scalar_select %p116, %s117, %s118
      %p122 = pneg %p116
      %p123 = scmp.eq.s32.totalorder %s16, 1
      %p124 = por %p122, %p123
      %p125 = scmp.ne.s32.totalorder %s117, %s120
      %p126 = scmp.eq.s32.totalorder %s16, 0
      %p127 = por %p125, %p126
      %p128 = scmp.ne.s32.totalorder %s117, %s120
      %p129 = scmp.eq.s32.totalorder %s21, 1
      %p130 = por %p128, %p129
      %p131 = scmp.ne.s32.totalorder %s120, %s121
      %p132 = scmp.eq.s32.totalorder %s21, 0
      %p133 = por %p131, %p132
      %p134 = scmp.ne.s32.totalorder %s120, %s121
      %p135 = scmp.eq.s32.totalorder %s22, 1
      %p136 = por %p134, %p135
      %p138 = scmp.ne.s32.totalorder %s121, %s137
      %p139 = scmp.eq.s32.totalorder %s22, 0
      %p140 = por %p138, %p139
      %p141 = scmp.le.s32.totalorder 1, %s16
      %p142 = scmp.lt.s32.totalorder %s16, 3
      %p143 = pnand %p141, %p142
      %p144 = pneg %p143
      // Predicated region
      $region9: #{tpu_custom_call.1} parent=5 // pred_check
        _
      $region10: #{tpu_custom_call.1} parent=5 // pred_check_branch
        %146 = sbr.rel (%p143) target = $region12
      $region11: #{tpu_custom_call.1} parent=5 // pred_region
        %s147 = ssub.s32 %s16, 1
        // Predicated region
        $region13: #{tpu_custom_call.1} parent=11 // pred_check
          %p148 = pneg %p49
        $region14: #{tpu_custom_call.1} parent=11 // pred_check_branch
          %150 = sbr.rel (%p148) target = $region16
        $region15: #{tpu_custom_call.1} parent=11 // pred_region
          %s152 = ssub.s32 1536, 1536
          %153 = vsyncadd [#allocation3], %s152
          %s154 = sshll.u32 [#allocation2], 4
          %s155 = int_to_ptr.vmem [resolvable:$true] %s154
          %160 = dma.hbm_to_vmem [thread:$0]  %s0, 1536, %s155, [#allocation3], 384, 384, 24
        $region16: #{tpu_custom_call.1} parent=11 // pred_fallthru
          _
      $region12: #{tpu_custom_call.1} parent=5 // pred_fallthru
        _
      %p161 = scmp.lt.s32.totalorder %s16, 2
      // Predicated region
      $region17: #{tpu_custom_call.1} parent=5 // pred_check
        %p162 = pneg %p161
      $region18: #{tpu_custom_call.1} parent=5 // pred_check_branch
        %164 = sbr.rel (%p162) target = $region20
      $region19: #{tpu_custom_call.1} parent=5 // pred_region
        // Predicated region
        $region21: #{tpu_custom_call.1} parent=19 // pred_check
          %p165 = pneg %p71
        $region22: #{tpu_custom_call.1} parent=19 // pred_check_branch
          %167 = sbr.rel (%p165) target = $region24
        $region23: #{tpu_custom_call.1} parent=19 // pred_region
          %s168 = sand.u32 %s16, 1
          %s169 = scalar_lea.sflag [#allocation6], %s168
          %s170 = sand.u32 %s61, 1
          %s171 = smul.addr %s170, 576
          %s172 = scalar_lea.vmem [#allocation5], %s171
          %s173 = smul.u32 2, %s24
          %s175 = ssub.s32 9216, 9216
          %176 = vsyncadd %s169, %s175
          %s177 = smul.addr %s23, 72
          %s178 = sadd.s32 %s173, %s177
          %s179 = smul.addr %s178, 128
          %s180 = scalar_lea.hbm %s1, %s179
          %s181 = sshll.u32 %s172, 4
          %s182 = int_to_ptr.vmem [resolvable:$true] %s181
          %187 = dma.hbm_to_vmem [thread:$0]  %s180, 9216, %s182, %s169, 256, 256, 16
        $region24: #{tpu_custom_call.1} parent=19 // pred_fallthru
          _
        // Predicated region
        $region25: #{tpu_custom_call.1} parent=19 // pred_check
          %p188 = pneg %p99
        $region26: #{tpu_custom_call.1} parent=19 // pred_check_branch
          %190 = sbr.rel (%p188) target = $region28
        $region27: #{tpu_custom_call.1} parent=19 // pred_region
          %s191 = sand.u32 %s16, 1
          %s192 = scalar_lea.sflag [#allocation6], %s191
          %s193 = sand.u32 %s89, 1
          %s194 = smul.addr %s193, 64
          %s195 = scalar_lea.vmem [#allocation7], %s194
          %s196 = smul.u32 2, %s24
          %s198 = ssub.s32 1024, 1024
          %199 = vsyncadd %s192, %s198
          %s200 = smul.addr %s23, 8
          %s201 = sadd.s32 %s196, %s200
          %s202 = smul.addr %s201, 128
          %s203 = scalar_lea.hbm %s2, %s202
          %s204 = sshll.u32 %s195, 4
          %s205 = int_to_ptr.vmem [resolvable:$true] %s204
          %210 = dma.hbm_to_vmem [thread:$0]  %s203, 1024, %s205, %s192, 256, 256, 16
        $region28: #{tpu_custom_call.1} parent=19 // pred_fallthru
          _
      $region20: #{tpu_custom_call.1} parent=5 // pred_fallthru
        _
      %p211 = scmp.le.s32.totalorder 1, %s16
      %p212 = scmp.lt.s32.totalorder %s16, 3
      %p213 = pnand %p211, %p212
      %p214 = pneg %p213
      // Predicated region
      $region29: #{tpu_custom_call.1} parent=5 // pred_check
        _
      $region30: #{tpu_custom_call.1} parent=5 // pred_check_branch
        %216 = sbr.rel (%p213) target = $region32
      $region31: #{tpu_custom_call.1} parent=5 // pred_region
        %s217 = ssub.s32 %s16, 1
        // Predicated region
        $region33: #{tpu_custom_call.1} parent=31 // pred_check
          %p218 = pneg %p49
        $region34: #{tpu_custom_call.1} parent=31 // pred_check_branch
          %220 = sbr.rel (%p218) target = $region36
        $region35: #{tpu_custom_call.1} parent=31 // pred_region
          %221 = dma.done [#allocation3], 1536
        $region36: #{tpu_custom_call.1} parent=31 // pred_fallthru
          _
        %s222 = sand.u32 %s21, 1
        %s223 = scalar_lea.sflag [#allocation6], %s222
        %s224 = sand.u32 %s64, 1
        %s225 = smul.addr %s224, 576
        %s226 = scalar_lea.vmem [#allocation5], %s225
        // Predicated region
        $region37: #{tpu_custom_call.1} parent=31 // pred_check
          %p227 = pneg %p77
        $region38: #{tpu_custom_call.1} parent=31 // pred_check_branch
          %229 = sbr.rel (%p227) target = $region40
        $region39: #{tpu_custom_call.1} parent=31 // pred_region
          %230 = dma.done %s223, 9216
        $region40: #{tpu_custom_call.1} parent=31 // pred_fallthru
          _
        %s231 = sand.u32 %s21, 1
        %s232 = scalar_lea.sflag [#allocation6], %s231
        %s233 = sand.u32 %s92, 1
        %s234 = smul.addr %s233, 64
        %s235 = scalar_lea.vmem [#allocation7], %s234
        // Predicated region
        $region41: #{tpu_custom_call.1} parent=31 // pred_check
          %p236 = pneg %p105
        $region42: #{tpu_custom_call.1} parent=31 // pred_check_branch
          %238 = sbr.rel (%p236) target = $region44
        $region43: #{tpu_custom_call.1} parent=31 // pred_region
          %239 = dma.done %s232, 1024
        $region44: #{tpu_custom_call.1} parent=31 // pred_fallthru
          _
        %p240 = pneg %p49
        %p241 = pneg %p46
        %s242 = sand.u32 %s21, 1
        %s243 = scalar_lea.sflag [#allocation6], %s242
        %s244 = sand.u32 %s64, 1
        %s245 = smul.addr %s244, 576
        %s246 = scalar_lea.vmem [#allocation5], %s245
        %p247 = pneg %p77
        %p248 = pneg %p74
        %s249 = sand.u32 %s21, 1
        %s250 = scalar_lea.sflag [#allocation6], %s249
        %s251 = sand.u32 %s92, 1
        %s252 = smul.addr %s251, 64
        %s253 = scalar_lea.vmem [#allocation7], %s252
        %p254 = pneg %p105
        %p255 = pneg %p102
        %p256 = pneg %p133
        %p257 = pneg %p130
        %s258 = sand.u32 %s120, 1
        %s259 = scalar_lea.sflag [#allocation4], %s258
        %s260 = sand.u32 %s120, 1
        %s261 = smul.addr %s260, 64
        %s262 = scalar_lea.vmem [#allocation8], %s261
        %s263 = smul.u32 2, %s26
        %s264 = smul.u32 2, %s26
        %s265 = smul.u32 2, %s26
        %v266 = vld [vmem:[#allocation2] sm:$0xff]
        %v267 = vld [vmem:[#allocation2 + $0x8] sm:$0xff]
        %v268 = vld [vmem:[#allocation2 + $0x10] sm:$0xff]
        %v269 = vld [vmem:[#allocation2 + $0x18] sm:$0xff]
        %v270 = vld [vmem:[#allocation2 + $0x20] sm:$0xff]
        %v271 = vld [vmem:[#allocation2 + $0x28] sm:$0xff]
        %v272 = vld [vmem:[#allocation2 + $0x30] sm:$0xff]
        %v273 = vld [vmem:[#allocation2 + $0x38] sm:$0xff]
        %v274 = vld [vmem:[#allocation2 + $0x40] sm:$0xff]
        %v275 = vld [vmem:[#allocation2 + $0x48] sm:$0xff]
        %v276 = vld [vmem:[#allocation2 + $0x50] sm:$0xff]
        %v277 = vld [vmem:[#allocation2 + $0x58] sm:$0xff]
        %v278 = vld [vmem:[%s226] sm:$0xff]
        %v279 = vld [vmem:[%s226 + $0x8] sm:$0xff]
        %v280 = vld [vmem:[%s226 + $0x10] sm:$0xff]
        %v281 = vld [vmem:[%s226 + $0x18] sm:$0xff]
        %v282 = vld [vmem:[%s226 + $0x20] sm:$0xff]
        %v283 = vld [vmem:[%s226 + $0x28] sm:$0xff]
        %v284 = vld [vmem:[%s226 + $0x30] sm:$0xff]
        %v285 = vld [vmem:[%s226 + $0x38] sm:$0xff]
        %v286 = vld [vmem:[%s226 + $0x40] sm:$0xff]
        %v287 = vld [vmem:[%s226 + $0x48] sm:$0xff]
        %v288 = vld [vmem:[%s226 + $0x50] sm:$0xff]
        %v289 = vld [vmem:[%s226 + $0x58] sm:$0xff]
        %v290 = vld [vmem:[%s226 + $0x60] sm:$0xff]
        %v291 = vld [vmem:[%s226 + $0x68] sm:$0xff]
        %v292 = vld [vmem:[%s226 + $0x70] sm:$0xff]
        %v293 = vld [vmem:[%s226 + $0x78] sm:$0xff]
        %v294 = vld [vmem:[%s226 + $0x80] sm:$0xff]
        %v295 = vld [vmem:[%s226 + $0x88] sm:$0xff]
        %v296 = vld [vmem:[%s226 + $0x90] sm:$0xff]
        %v297 = vld [vmem:[%s226 + $0x98] sm:$0xff]
        %v298 = vld [vmem:[%s226 + $0xa0] sm:$0xff]
        %v299 = vld [vmem:[%s226 + $0xa8] sm:$0xff]
        %v300 = vld [vmem:[%s226 + $0xb0] sm:$0xff]
        %v301 = vld [vmem:[%s226 + $0xb8] sm:$0xff]
        %v302 = vld [vmem:[%s226 + $0xc0] sm:$0xff]
        %v303 = vld [vmem:[%s226 + $0xc8] sm:$0xff]
        %v304 = vld [vmem:[%s226 + $0xd0] sm:$0xff]
        %v305 = vld [vmem:[%s226 + $0xd8] sm:$0xff]
        %v306 = vld [vmem:[%s226 + $0xe0] sm:$0xff]
        %v307 = vld [vmem:[%s226 + $0xe8] sm:$0xff]
        %v308 = vld [vmem:[%s226 + $0xf0] sm:$0xff]
        %v309 = vld [vmem:[%s226 + $0xf8] sm:$0xff]
        %v310 = vld [vmem:[%s226 + $0x100] sm:$0xff]
        %v311 = vld [vmem:[%s226 + $0x108] sm:$0xff]
        %v312 = vld [vmem:[%s226 + $0x110] sm:$0xff]
        %v313 = vld [vmem:[%s226 + $0x118] sm:$0xff]
        %v314 = vld [vmem:[%s226 + $0x120] sm:$0xff]
        %v315 = vld [vmem:[%s226 + $0x128] sm:$0xff]
        %v316 = vld [vmem:[%s226 + $0x130] sm:$0xff]
        %v317 = vld [vmem:[%s226 + $0x138] sm:$0xff]
        %v318 = vld [vmem:[%s226 + $0x140] sm:$0xff]
        %v319 = vld [vmem:[%s226 + $0x148] sm:$0xff]
        %v320 = vld [vmem:[%s226 + $0x150] sm:$0xff]
        %v321 = vld [vmem:[%s226 + $0x158] sm:$0xff]
        %v322 = vld [vmem:[%s226 + $0x160] sm:$0xff]
        %v323 = vld [vmem:[%s226 + $0x168] sm:$0xff]
        %v324 = vld [vmem:[%s226 + $0x170] sm:$0xff]
        %v325 = vld [vmem:[%s226 + $0x178] sm:$0xff]
        %v326 = vld [vmem:[%s226 + $0x180] sm:$0xff]
        %v327 = vld [vmem:[%s226 + $0x188] sm:$0xff]
        %v328 = vld [vmem:[%s226 + $0x190] sm:$0xff]
        %v329 = vld [vmem:[%s226 + $0x198] sm:$0xff]
        %v330 = vld [vmem:[%s226 + $0x1a0] sm:$0xff]
        %v331 = vld [vmem:[%s226 + $0x1a8] sm:$0xff]
        %v332 = vld [vmem:[%s226 + $0x1b0] sm:$0xff]
        %v333 = vld [vmem:[%s226 + $0x1b8] sm:$0xff]
        %v334 = vld [vmem:[%s226 + $0x1c0] sm:$0xff]
        %v335 = vld [vmem:[%s226 + $0x1c8] sm:$0xff]
        %v336 = vld [vmem:[%s226 + $0x1d0] sm:$0xff]
        %v337 = vld [vmem:[%s226 + $0x1d8] sm:$0xff]
        %v338 = vld [vmem:[%s226 + $0x1e0] sm:$0xff]
        %v339 = vld [vmem:[%s226 + $0x1e8] sm:$0xff]
        %v340 = vld [vmem:[%s226 + $0x1f0] sm:$0xff]
        %v341 = vld [vmem:[%s226 + $0x1f8] sm:$0xff]
        %v342 = vld [vmem:[%s226 + $0x200] sm:$0xff]
        %v343 = vld [vmem:[%s226 + $0x208] sm:$0xff]
        %v344 = vld [vmem:[%s226 + $0x210] sm:$0xff]
        %v345 = vld [vmem:[%s226 + $0x218] sm:$0xff]
        %v346 = vld [vmem:[%s226 + $0x220] sm:$0xff]
        %v347 = vld [vmem:[%s226 + $0x228] sm:$0xff]
        %v348 = vld [vmem:[%s226 + $0x230] sm:$0xff]
        %v349 = vld [vmem:[%s226 + $0x238] sm:$0xff]
        %vm350 = vcmask 261120
        %v352 = vsel %vm350, %v268, 0
        %v355 = vsel %vm350, %v271, 0
        %v358 = vsel %vm350, %v274, 0
        %v361 = vsel %vm350, %v277, 0
        %v363 = vand.u32 %v279, 4294901760
        %364 = vmatprep.subr.mxu0 %v363
        %v365 = vand.u32 %v278, 4294901760
        %366 = vmatpush1.msra.mxu0 %v365
        %v367 = vand.u32 %v281, 4294901760
        %368 = vmatprep.subr.mxu0 %v367
        %v369 = vand.u32 %v280, 4294901760
        %370 = vmatpush1.msra.mxu0 %v369
        %v371 = vand.u32 %v283, 4294901760
        %372 = vmatprep.subr.mxu0 %v371
        %v373 = vand.u32 %v282, 4294901760
        %374 = vmatpush1.msra.mxu0 %v373
        %v375 = vand.u32 %v285, 4294901760
        %376 = vmatprep.subr.mxu0 %v375
        %v377 = vand.u32 %v284, 4294901760
        %378 = vmatpush1.msra.mxu0 %v377
        %v379 = vand.u32 %v287, 4294901760
        %380 = vmatprep.subr.mxu0 %v379
        %v381 = vand.u32 %v286, 4294901760
        %382 = vmatpush1.msra.mxu0 %v381
        %v383 = vand.u32 %v289, 4294901760
        %384 = vmatprep.subr.mxu0 %v383
        %v385 = vand.u32 %v288, 4294901760
        %386 = vmatpush1.msra.mxu0 %v385
        %v387 = vand.u32 %v291, 4294901760
        %388 = vmatprep.subr.mxu0 %v387
        %v389 = vand.u32 %v290, 4294901760
        %390 = vmatpush1.msra.mxu0 %v389
        %v391 = vand.u32 %v293, 4294901760
        %392 = vmatprep.subr.mxu0 %v391
        %v393 = vand.u32 %v292, 4294901760
        %394 = vmatpush1.msra.mxu0 %v393
        %v395 = vand.u32 %v295, 4294901760
        %396 = vmatprep.subr.mxu0 %v395
        %v397 = vand.u32 %v294, 4294901760
        %398 = vmatpush1.msra.mxu0 %v397
        %v399 = vand.u32 %v297, 4294901760
        %400 = vmatprep.subr.mxu0 %v399
        %v401 = vand.u32 %v296, 4294901760
        %402 = vmatpush1.msra.mxu0 %v401
        %v403 = vand.u32 %v299, 4294901760
        %404 = vmatprep.subr.mxu0 %v403
        %v405 = vand.u32 %v298, 4294901760
        %406 = vmatpush1.msra.mxu0 %v405
        %v407 = vand.u32 %v301, 4294901760
        %408 = vmatprep.subr.mxu0 %v407
        %v409 = vand.u32 %v300, 4294901760
        %410 = vmatpush1.msra.mxu0 %v409
        %v411 = vand.u32 %v303, 4294901760
        %412 = vmatprep.subr.mxu0 %v411
        %v413 = vand.u32 %v302, 4294901760
        %414 = vmatpush1.msra.mxu0 %v413
        %v415 = vand.u32 %v305, 4294901760
        %416 = vmatprep.subr.mxu0 %v415
        %v417 = vand.u32 %v304, 4294901760
        %418 = vmatpush1.msra.mxu0 %v417
        %v419 = vand.u32 %v307, 4294901760
        %420 = vmatprep.subr.mxu0 %v419
        %v421 = vand.u32 %v306, 4294901760
        %422 = vmatpush1.msra.mxu0 %v421
        %v423 = vand.u32 %v309, 4294901760
        %424 = vmatprep.subr.mxu0 %v423
        %v425 = vand.u32 %v308, 4294901760
        %426 = vmatpush1.msra.mxu0 %v425
        %v427 = vand.u32 %v311, 4294901760
        %428 = vmatprep.subr.mxu0 %v427
        %v429 = vand.u32 %v310, 4294901760
        %430 = vmatpush1.msra.mxu0 %v429
        %v431 = vand.u32 %v313, 4294901760
        %432 = vmatprep.subr.mxu0 %v431
        %v433 = vand.u32 %v312, 4294901760
        %434 = vmatpush1.msra.mxu0 %v433
        %v435 = vand.u32 %v315, 4294901760
        %436 = vmatprep.subr.mxu0 %v435
        %v437 = vand.u32 %v314, 4294901760
        %438 = vmatpush1.msra.mxu0 %v437
        %v439 = vand.u32 %v317, 4294901760
        %440 = vmatprep.subr.mxu0 %v439
        %v441 = vand.u32 %v316, 4294901760
        %442 = vmatpush1.msra.mxu0 %v441
        %v443 = vand.u32 %v319, 4294901760
        %444 = vmatprep.subr.mxu0 %v443
        %v445 = vand.u32 %v318, 4294901760
        %446 = vmatpush1.msra.mxu0 %v445
        %v447 = vand.u32 %v321, 4294901760
        %448 = vmatprep.subr.mxu0 %v447
        %v449 = vand.u32 %v320, 4294901760
        %450 = vmatpush1.msra.mxu0 %v449
        %v451 = vand.u32 %v323, 4294901760
        %452 = vmatprep.subr.mxu0 %v451
        %v453 = vand.u32 %v322, 4294901760
        %454 = vmatpush1.msra.mxu0 %v453
        %v455 = vand.u32 %v325, 4294901760
        %456 = vmatprep.subr.mxu0 %v455
        %v457 = vand.u32 %v324, 4294901760
        %458 = vmatpush1.msra.mxu0 %v457
        %v459 = vand.u32 %v327, 4294901760
        %460 = vmatprep.subr.mxu0 %v459
        %v461 = vand.u32 %v326, 4294901760
        %462 = vmatpush1.msra.mxu0 %v461
        %v463 = vand.u32 %v329, 4294901760
        %464 = vmatprep.subr.mxu0 %v463
        %v465 = vand.u32 %v328, 4294901760
        %466 = vmatpush1.msra.mxu0 %v465
        %v467 = vand.u32 %v331, 4294901760
        %468 = vmatprep.subr.mxu0 %v467
        %v469 = vand.u32 %v330, 4294901760
        %470 = vmatpush1.msra.mxu0 %v469
        %v471 = vand.u32 %v333, 4294901760
        %472 = vmatprep.subr.mxu0 %v471
        %v473 = vand.u32 %v332, 4294901760
        %474 = vmatpush1.msra.mxu0 %v473
        %v475 = vand.u32 %v335, 4294901760
        %476 = vmatprep.subr.mxu0 %v475
        %v477 = vand.u32 %v334, 4294901760
        %478 = vmatpush1.msra.mxu0 %v477
        %v479 = vand.u32 %v337, 4294901760
        %480 = vmatprep.subr.mxu0 %v479
        %v481 = vand.u32 %v336, 4294901760
        %482 = vmatpush1.msra.mxu0 %v481
        %v483 = vand.u32 %v339, 4294901760
        %484 = vmatprep.subr.mxu0 %v483
        %v485 = vand.u32 %v338, 4294901760
        %486 = vmatpush1.msra.mxu0 %v485
        %v487 = vand.u32 %v341, 4294901760
        %488 = vmatprep.subr.mxu0 %v487
        %v489 = vand.u32 %v340, 4294901760
        %490 = vmatpush1.msra.mxu0 %v489
        %v491 = vand.u32 %v267, 4294901760
        %v492 = vsub.f32 %v267, %v491
        %v493 = vand.u32 %v492, 4294901760
        %v494 = vsub.f32 %v492, %v493
        %v495 = vand.u32 %v494, 4294901760
        %496 = vmatprep.mubr.f32.mxu0 %v495
        %v497 = vand.u32 %v266, 4294901760
        %v498 = vsub.f32 %v266, %v497
        %v499 = vand.u32 %v498, 4294901760
        %v500 = vsub.f32 %v498, %v499
        %v501 = vand.u32 %v500, 4294901760
        %502 = vmatmul.mubr.f32.gmra.mrb[0].mxu0 %v501
        %v503 = vpop.f32.mrb[0].mxu0
        %v504 = vadd.f32 0.0, %v503
        %v505 = vpop.f32.mrb[0].mxu0
        %v506 = vadd.f32 0.0, %v505
        %v507 = vand.u32 %v270, 4294901760
        %v508 = vsub.f32 %v270, %v507
        %v509 = vand.u32 %v508, 4294901760
        %v510 = vsub.f32 %v508, %v509
        %v511 = vand.u32 %v510, 4294901760
        %512 = vmatprep.mubr.f32.mxu0 %v511
        %v513 = vand.u32 %v269, 4294901760
        %v514 = vsub.f32 %v269, %v513
        %v515 = vand.u32 %v514, 4294901760
        %v516 = vsub.f32 %v514, %v515
        %v517 = vand.u32 %v516, 4294901760
        %518 = vmatmul.mubr.f32.gmra.mrb[0].mxu0 %v517
        %v519 = vpop.f32.mrb[0].mxu0
        %v520 = vadd.f32 0.0, %v519
        %v521 = vpop.f32.mrb[0].mxu0
        %v522 = vadd.f32 0.0, %v521
        %v523 = vand.u32 %v273, 4294901760
        %v524 = vsub.f32 %v273, %v523
        %v525 = vand.u32 %v524, 4294901760
        %v526 = vsub.f32 %v524, %v525
        %v527 = vand.u32 %v526, 4294901760
        %528 = vmatprep.mubr.f32.mxu0 %v527
        %v529 = vand.u32 %v272, 4294901760
        %v530 = vsub.f32 %v272, %v529
        %v531 = vand.u32 %v530, 4294901760
        %v532 = vsub.f32 %v530, %v531
        %v533 = vand.u32 %v532, 4294901760
        %534 = vmatmul.mubr.f32.gmra.mrb[0].mxu0 %v533
        %v535 = vpop.f32.mrb[0].mxu0
        %v536 = vadd.f32 0.0, %v535
        %v537 = vpop.f32.mrb[0].mxu0
        %v538 = vadd.f32 0.0, %v537
        %v539 = vand.u32 %v276, 4294901760
        %v540 = vsub.f32 %v276, %v539
        %v541 = vand.u32 %v540, 4294901760
        %v542 = vsub.f32 %v540, %v541
        %v543 = vand.u32 %v542, 4294901760
        %544 = vmatprep.mubr.f32.mxu0 %v543
        %v545 = vand.u32 %v275, 4294901760
        %v546 = vsub.f32 %v275, %v545
        %v547 = vand.u32 %v546, 4294901760
        %v548 = vsub.f32 %v546, %v547
        %v549 = vand.u32 %v548, 4294901760
        %550 = vmatmul.mubr.f32.gmra.mrb[0].mxu0 %v549
        %v551 = vpop.f32.mrb[0].mxu0
        %v552 = vadd.f32 0.0, %v551
        %v553 = vpop.f32.mrb[0].mxu0
        %v554 = vadd.f32 0.0, %v553
        %555 = vdwg.mxu0
        %v556 = vand.u32 %v279, 4294901760
        %v557 = vsub.f32 %v279, %v556
        %v558 = vand.u32 %v557, 4294901760
        %v559 = vsub.f32 %v557, %v558
        %v560 = vand.u32 %v559, 4294901760
        %561 = vmatprep.subr.mxu0 %v560
        %v562 = vand.u32 %v278, 4294901760
        %v563 = vsub.f32 %v278, %v562
        %v564 = vand.u32 %v563, 4294901760
        %v565 = vsub.f32 %v563, %v564
        %v566 = vand.u32 %v565, 4294901760
        %567 = vmatpush1.msra.mxu0 %v566
        %v568 = vand.u32 %v281, 4294901760
        %v569 = vsub.f32 %v281, %v568
        %v570 = vand.u32 %v569, 4294901760
        %v571 = vsub.f32 %v569, %v570
        %v572 = vand.u32 %v571, 4294901760
        %573 = vmatprep.subr.mxu0 %v572
        %v574 = vand.u32 %v280, 4294901760
        %v575 = vsub.f32 %v280, %v574
        %v576 = vand.u32 %v575, 4294901760
        %v577 = vsub.f32 %v575, %v576
        %v578 = vand.u32 %v577, 4294901760
        %579 = vmatpush1.msra.mxu0 %v578
        %v580 = vand.u32 %v283, 4294901760
        %v581 = vsub.f32 %v283, %v580
        %v582 = vand.u32 %v581, 4294901760
        %v583 = vsub.f32 %v581, %v582
        %v584 = vand.u32 %v583, 4294901760
        %585 = vmatprep.subr.mxu0 %v584
        %v586 = vand.u32 %v282, 4294901760
        %v587 = vsub.f32 %v282, %v586
        %v588 = vand.u32 %v587, 4294901760
        %v589 = vsub.f32 %v587, %v588
        %v590 = vand.u32 %v589, 4294901760
        %591 = vmatpush1.msra.mxu0 %v590
        %v592 = vand.u32 %v285, 4294901760
        %v593 = vsub.f32 %v285, %v592
        %v594 = vand.u32 %v593, 4294901760
        %v595 = vsub.f32 %v593, %v594
        %v596 = vand.u32 %v595, 4294901760
        %597 = vmatprep.subr.mxu0 %v596
        %v598 = vand.u32 %v284, 4294901760
        %v599 = vsub.f32 %v284, %v598
        %v600 = vand.u32 %v599, 4294901760
        %v601 = vsub.f32 %v599, %v600
        %v602 = vand.u32 %v601, 4294901760
        %603 = vmatpush1.msra.mxu0 %v602
        %v604 = vand.u32 %v287, 4294901760
        %v605 = vsub.f32 %v287, %v604
        %v606 = vand.u32 %v605, 4294901760
        %v607 = vsub.f32 %v605, %v606
        %v608 = vand.u32 %v607, 4294901760
        %609 = vmatprep.subr.mxu0 %v608
        %v610 = vand.u32 %v286, 4294901760
        %v611 = vsub.f32 %v286, %v610
        %v612 = vand.u32 %v611, 4294901760
        %v613 = vsub.f32 %v611, %v612
        %v614 = vand.u32 %v613, 4294901760
        %615 = vmatpush1.msra.mxu0 %v614
        %v616 = vand.u32 %v289, 4294901760
        %v617 = vsub.f32 %v289, %v616
        %v618 = vand.u32 %v617, 4294901760
        %v619 = vsub.f32 %v617, %v618
        %v620 = vand.u32 %v619, 4294901760
        %621 = vmatprep.subr.mxu0 %v620
        %v622 = vand.u32 %v288, 4294901760
        %v623 = vsub.f32 %v288, %v622
        %v624 = vand.u32 %v623, 4294901760
        %v625 = vsub.f32 %v623, %v624
        %v626 = vand.u32 %v625, 4294901760
        %627 = vmatpush1.msra.mxu0 %v626
        %v628 = vand.u32 %v291, 4294901760
        %v629 = vsub.f32 %v291, %v628
        %v630 = vand.u32 %v629, 4294901760
        %v631 = vsub.f32 %v629, %v630
        %v632 = vand.u32 %v631, 4294901760
        %633 = vmatprep.subr.mxu0 %v632
        %v634 = vand.u32 %v290, 4294901760
        %v635 = vsub.f32 %v290, %v634
        %v636 = vand.u32 %v635, 4294901760
        %v637 = vsub.f32 %v635, %v636
        %v638 = vand.u32 %v637, 4294901760
        %639 = vmatpush1.msra.mxu0 %v638
        %v640 = vand.u32 %v293, 4294901760
        %v641 = vsub.f32 %v293, %v640
        %v642 = vand.u32 %v641, 4294901760
        %v643 = vsub.f32 %v641, %v642
        %v644 = vand.u32 %v643, 4294901760
        %645 = vmatprep.subr.mxu0 %v644
        %v646 = vand.u32 %v292, 4294901760
        %v647 = vsub.f32 %v292, %v646
        %v648 = vand.u32 %v647, 4294901760
        %v649 = vsub.f32 %v647, %v648
        %v650 = vand.u32 %v649, 4294901760
        %651 = vmatpush1.msra.mxu0 %v650
        %v652 = vand.u32 %v295, 4294901760
        %v653 = vsub.f32 %v295, %v652
        %v654 = vand.u32 %v653, 4294901760
        %v655 = vsub.f32 %v653, %v654
        %v656 = vand.u32 %v655, 4294901760
        %657 = vmatprep.subr.mxu0 %v656
        %v658 = vand.u32 %v294, 4294901760
        %v659 = vsub.f32 %v294, %v658
        %v660 = vand.u32 %v659, 4294901760
        %v661 = vsub.f32 %v659, %v660
        %v662 = vand.u32 %v661, 4294901760
        %663 = vmatpush1.msra.mxu0 %v662
        %v664 = vand.u32 %v297, 4294901760
        %v665 = vsub.f32 %v297, %v664
        %v666 = vand.u32 %v665, 4294901760
        %v667 = vsub.f32 %v665, %v666
        %v668 = vand.u32 %v667, 4294901760
        %669 = vmatprep.subr.mxu0 %v668
        %v670 = vand.u32 %v296, 4294901760
        %v671 = vsub.f32 %v296, %v670
        %v672 = vand.u32 %v671, 4294901760
        %v673 = vsub.f32 %v671, %v672
        %v674 = vand.u32 %v673, 4294901760
        %675 = vmatpush1.msra.mxu0 %v674
        %v676 = vand.u32 %v299, 4294901760
        %v677 = vsub.f32 %v299, %v676
        %v678 = vand.u32 %v677, 4294901760
        %v679 = vsub.f32 %v677, %v678
        %v680 = vand.u32 %v679, 4294901760
        %681 = vmatprep.subr.mxu0 %v680
        %v682 = vand.u32 %v298, 4294901760
        %v683 = vsub.f32 %v298, %v682
        %v684 = vand.u32 %v683, 4294901760
        %v685 = vsub.f32 %v683, %v684
        %v686 = vand.u32 %v685, 4294901760
        %687 = vmatpush1.msra.mxu0 %v686
        %v688 = vand.u32 %v301, 4294901760
        %v689 = vsub.f32 %v301, %v688
        %v690 = vand.u32 %v689, 4294901760
        %v691 = vsub.f32 %v689, %v690
        %v692 = vand.u32 %v691, 4294901760
        %693 = vmatprep.subr.mxu0 %v692
        %v694 = vand.u32 %v300, 4294901760
        %v695 = vsub.f32 %v300, %v694
        %v696 = vand.u32 %v695, 4294901760
        %v697 = vsub.f32 %v695, %v696
        %v698 = vand.u32 %v697, 4294901760
        %699 = vmatpush1.msra.mxu0 %v698
        %v700 = vand.u32 %v303, 4294901760
        %v701 = vsub.f32 %v303, %v700
        %v702 = vand.u32 %v701, 4294901760
        %v703 = vsub.f32 %v701, %v702
        %v704 = vand.u32 %v703, 4294901760
        %705 = vmatprep.subr.mxu0 %v704
        %v706 = vand.u32 %v302, 4294901760
        %v707 = vsub.f32 %v302, %v706
        %v708 = vand.u32 %v707, 4294901760
        %v709 = vsub.f32 %v707, %v708
        %v710 = vand.u32 %v709, 4294901760
        %711 = vmatpush1.msra.mxu0 %v710
        %v712 = vand.u32 %v305, 4294901760
        %v713 = vsub.f32 %v305, %v712
        %v714 = vand.u32 %v713, 4294901760
        %v715 = vsub.f32 %v713, %v714
        %v716 = vand.u32 %v715, 4294901760
        %717 = vmatprep.subr.mxu0 %v716
        %v718 = vand.u32 %v304, 4294901760
        %v719 = vsub.f32 %v304, %v718
        %v720 = vand.u32 %v719, 4294901760
        %v721 = vsub.f32 %v719, %v720
        %v722 = vand.u32 %v721, 4294901760
        %723 = vmatpush1.msra.mxu0 %v722
        %v724 = vand.u32 %v307, 4294901760
        %v725 = vsub.f32 %v307, %v724
        %v726 = vand.u32 %v725, 4294901760
        %v727 = vsub.f32 %v725, %v726
        %v728 = vand.u32 %v727, 4294901760
        %729 = vmatprep.subr.mxu0 %v728
        %v730 = vand.u32 %v306, 4294901760
        %v731 = vsub.f32 %v306, %v730
        %v732 = vand.u32 %v731, 4294901760
        %v733 = vsub.f32 %v731, %v732
        %v734 = vand.u32 %v733, 4294901760
        %735 = vmatpush1.msra.mxu0 %v734
        %v736 = vand.u32 %v309, 4294901760
        %v737 = vsub.f32 %v309, %v736
        %v738 = vand.u32 %v737, 4294901760
        %v739 = vsub.f32 %v737, %v738
        %v740 = vand.u32 %v739, 4294901760
        %741 = vmatprep.subr.mxu0 %v740
        %v742 = vand.u32 %v308, 4294901760
        %v743 = vsub.f32 %v308, %v742
        %v744 = vand.u32 %v743, 4294901760
        %v745 = vsub.f32 %v743, %v744
        %v746 = vand.u32 %v745, 4294901760
        %747 = vmatpush1.msra.mxu0 %v746
        %v748 = vand.u32 %v311, 4294901760
        %v749 = vsub.f32 %v311, %v748
        %v750 = vand.u32 %v749, 4294901760
        %v751 = vsub.f32 %v749, %v750
        %v752 = vand.u32 %v751, 4294901760
        %753 = vmatprep.subr.mxu0 %v752
        %v754 = vand.u32 %v310, 4294901760
        %v755 = vsub.f32 %v310, %v754
        %v756 = vand.u32 %v755, 4294901760
        %v757 = vsub.f32 %v755, %v756
        %v758 = vand.u32 %v757, 4294901760
        %759 = vmatpush1.msra.mxu0 %v758
        %v760 = vand.u32 %v313, 4294901760
        %v761 = vsub.f32 %v313, %v760
        %v762 = vand.u32 %v761, 4294901760
        %v763 = vsub.f32 %v761, %v762
        %v764 = vand.u32 %v763, 4294901760
        %765 = vmatprep.subr.mxu0 %v764
        %v766 = vand.u32 %v312, 4294901760
        %v767 = vsub.f32 %v312, %v766
        %v768 = vand.u32 %v767, 4294901760
        %v769 = vsub.f32 %v767, %v768
        %v770 = vand.u32 %v769, 4294901760
        %771 = vmatpush1.msra.mxu0 %v770
        %v772 = vand.u32 %v315, 4294901760
        %v773 = vsub.f32 %v315, %v772
        %v774 = vand.u32 %v773, 4294901760
        %v775 = vsub.f32 %v773, %v774
        %v776 = vand.u32 %v775, 4294901760
        %777 = vmatprep.subr.mxu0 %v776
        %v778 = vand.u32 %v314, 4294901760
        %v779 = vsub.f32 %v314, %v778
        %v780 = vand.u32 %v779, 4294901760
        %v781 = vsub.f32 %v779, %v780
        %v782 = vand.u32 %v781, 4294901760
        %783 = vmatpush1.msra.mxu0 %v782
        %v784 = vand.u32 %v317, 4294901760
        %v785 = vsub.f32 %v317, %v784
        %v786 = vand.u32 %v785, 4294901760
        %v787 = vsub.f32 %v785, %v786
        %v788 = vand.u32 %v787, 4294901760
        %789 = vmatprep.subr.mxu0 %v788
        %v790 = vand.u32 %v316, 4294901760
        %v791 = vsub.f32 %v316, %v790
        %v792 = vand.u32 %v791, 4294901760
        %v793 = vsub.f32 %v791, %v792
        %v794 = vand.u32 %v793, 4294901760
        %795 = vmatpush1.msra.mxu0 %v794
        %v796 = vand.u32 %v319, 4294901760
        %v797 = vsub.f32 %v319, %v796
        %v798 = vand.u32 %v797, 4294901760
        %v799 = vsub.f32 %v797, %v798
        %v800 = vand.u32 %v799, 4294901760
        %801 = vmatprep.subr.mxu0 %v800
        %v802 = vand.u32 %v318, 4294901760
        %v803 = vsub.f32 %v318, %v802
        %v804 = vand.u32 %v803, 4294901760
        %v805 = vsub.f32 %v803, %v804
        %v806 = vand.u32 %v805, 4294901760
        %807 = vmatpush1.msra.mxu0 %v806
        %v808 = vand.u32 %v321, 4294901760
        %v809 = vsub.f32 %v321, %v808
        %v810 = vand.u32 %v809, 4294901760
        %v811 = vsub.f32 %v809, %v810
        %v812 = vand.u32 %v811, 4294901760
        %813 = vmatprep.subr.mxu0 %v812
        %v814 = vand.u32 %v320, 4294901760
        %v815 = vsub.f32 %v320, %v814
        %v816 = vand.u32 %v815, 4294901760
        %v817 = vsub.f32 %v815, %v816
        %v818 = vand.u32 %v817, 4294901760
        %819 = vmatpush1.msra.mxu0 %v818
        %v820 = vand.u32 %v323, 4294901760
        %v821 = vsub.f32 %v323, %v820
        %v822 = vand.u32 %v821, 4294901760
        %v823 = vsub.f32 %v821, %v822
        %v824 = vand.u32 %v823, 4294901760
        %825 = vmatprep.subr.mxu0 %v824
        %v826 = vand.u32 %v322, 4294901760
        %v827 = vsub.f32 %v322, %v826
        %v828 = vand.u32 %v827, 4294901760
        %v829 = vsub.f32 %v827, %v828
        %v830 = vand.u32 %v829, 4294901760
        %831 = vmatpush1.msra.mxu0 %v830
        %v832 = vand.u32 %v325, 4294901760
        %v833 = vsub.f32 %v325, %v832
        %v834 = vand.u32 %v833, 4294901760
        %v835 = vsub.f32 %v833, %v834
        %v836 = vand.u32 %v835, 4294901760
        %837 = vmatprep.subr.mxu0 %v836
        %v838 = vand.u32 %v324, 4294901760
        %v839 = vsub.f32 %v324, %v838
        %v840 = vand.u32 %v839, 4294901760
        %v841 = vsub.f32 %v839, %v840
        %v842 = vand.u32 %v841, 4294901760
        %843 = vmatpush1.msra.mxu0 %v842
        %v844 = vand.u32 %v327, 4294901760
        %v845 = vsub.f32 %v327, %v844
        %v846 = vand.u32 %v845, 4294901760
        %v847 = vsub.f32 %v845, %v846
        %v848 = vand.u32 %v847, 4294901760
        %849 = vmatprep.subr.mxu0 %v848
        %v850 = vand.u32 %v326, 4294901760
        %v851 = vsub.f32 %v326, %v850
        %v852 = vand.u32 %v851, 4294901760
        %v853 = vsub.f32 %v851, %v852
        %v854 = vand.u32 %v853, 4294901760
        %855 = vmatpush1.msra.mxu0 %v854
        %v856 = vand.u32 %v329, 4294901760
        %v857 = vsub.f32 %v329, %v856
        %v858 = vand.u32 %v857, 4294901760
        %v859 = vsub.f32 %v857, %v858
        %v860 = vand.u32 %v859, 4294901760
        %861 = vmatprep.subr.mxu0 %v860
        %v862 = vand.u32 %v328, 4294901760
        %v863 = vsub.f32 %v328, %v862
        %v864 = vand.u32 %v863, 4294901760
        %v865 = vsub.f32 %v863, %v864
        %v866 = vand.u32 %v865, 4294901760
        %867 = vmatpush1.msra.mxu0 %v866
        %v868 = vand.u32 %v331, 4294901760
        %v869 = vsub.f32 %v331, %v868
        %v870 = vand.u32 %v869, 4294901760
        %v871 = vsub.f32 %v869, %v870
        %v872 = vand.u32 %v871, 4294901760
        %873 = vmatprep.subr.mxu0 %v872
        %v874 = vand.u32 %v330, 4294901760
        %v875 = vsub.f32 %v330, %v874
        %v876 = vand.u32 %v875, 4294901760
        %v877 = vsub.f32 %v875, %v876
        %v878 = vand.u32 %v877, 4294901760
        %879 = vmatpush1.msra.mxu0 %v878
        %v880 = vand.u32 %v333, 4294901760
        %v881 = vsub.f32 %v333, %v880
        %v882 = vand.u32 %v881, 4294901760
        %v883 = vsub.f32 %v881, %v882
        %v884 = vand.u32 %v883, 4294901760
        %885 = vmatprep.subr.mxu0 %v884
        %v886 = vand.u32 %v332, 4294901760
        %v887 = vsub.f32 %v332, %v886
        %v888 = vand.u32 %v887, 4294901760
        %v889 = vsub.f32 %v887, %v888
        %v890 = vand.u32 %v889, 4294901760
        %891 = vmatpush1.msra.mxu0 %v890
        %v892 = vand.u32 %v335, 4294901760
        %v893 = vsub.f32 %v335, %v892
        %v894 = vand.u32 %v893, 4294901760
        %v895 = vsub.f32 %v893, %v894
        %v896 = vand.u32 %v895, 4294901760
        %897 = vmatprep.subr.mxu0 %v896
        %v898 = vand.u32 %v334, 4294901760
        %v899 = vsub.f32 %v334, %v898
        %v900 = vand.u32 %v899, 4294901760
        %v901 = vsub.f32 %v899, %v900
        %v902 = vand.u32 %v901, 4294901760
        %903 = vmatpush1.msra.mxu0 %v902
        %v904 = vand.u32 %v337, 4294901760
        %v905 = vsub.f32 %v337, %v904
        %v906 = vand.u32 %v905, 4294901760
        %v907 = vsub.f32 %v905, %v906
        %v908 = vand.u32 %v907, 4294901760
        %909 = vmatprep.subr.mxu0 %v908
        %v910 = vand.u32 %v336, 4294901760
        %v911 = vsub.f32 %v336, %v910
        %v912 = vand.u32 %v911, 4294901760
        %v913 = vsub.f32 %v911, %v912
        %v914 = vand.u32 %v913, 4294901760
        %915 = vmatpush1.msra.mxu0 %v914
        %v916 = vand.u32 %v339, 4294901760
        %v917 = vsub.f32 %v339, %v916
        %v918 = vand.u32 %v917, 4294901760
        %v919 = vsub.f32 %v917, %v918
        %v920 = vand.u32 %v919, 4294901760
        %921 = vmatprep.subr.mxu0 %v920
        %v922 = vand.u32 %v338, 4294901760
        %v923 = vsub.f32 %v338, %v922
        %v924 = vand.u32 %v923, 4294901760
        %v925 = vsub.f32 %v923, %v924
        %v926 = vand.u32 %v925, 4294901760
        %927 = vmatpush1.msra.mxu0 %v926
        %v928 = vand.u32 %v341, 4294901760
        %v929 = vsub.f32 %v341, %v928
        %v930 = vand.u32 %v929, 4294901760
        %v931 = vsub.f32 %v929, %v930
        %v932 = vand.u32 %v931, 4294901760
        %933 = vmatprep.subr.mxu0 %v932
        %v934 = vand.u32 %v340, 4294901760
        %v935 = vsub.f32 %v340, %v934
        %v936 = vand.u32 %v935, 4294901760
        %v937 = vsub.f32 %v935, %v936
        %v938 = vand.u32 %v937, 4294901760
        %939 = vmatpush1.msra.mxu0 %v938
        %v940 = vand.u32 %v267, 4294901760
        %941 = vmatprep.mubr.f32.mxu0 %v940
        %v942 = vand.u32 %v266, 4294901760
        %943 = vmatmul.mubr.f32.gmra.mrb[0].mxu0 %v942
        %v944 = vpop.f32.mrb[0].mxu0
        %v945 = vadd.f32 %v504, %v944
        %v946 = vpop.f32.mrb[0].mxu0
        %v947 = vadd.f32 %v506, %v946
        %v948 = vand.u32 %v270, 4294901760
        %949 = vmatprep.mubr.f32.mxu0 %v948
        %v950 = vand.u32 %v269, 4294901760
        %951 = vmatmul.mubr.f32.gmra.mrb[0].mxu0 %v950
        %v952 = vpop.f32.mrb[0].mxu0
        %v953 = vadd.f32 %v520, %v952
        %v954 = vpop.f32.mrb[0].mxu0
        %v955 = vadd.f32 %v522, %v954
        %v956 = vand.u32 %v273, 4294901760
        %957 = vmatprep.mubr.f32.mxu0 %v956
        %v958 = vand.u32 %v272, 4294901760
        %959 = vmatmul.mubr.f32.gmra.mrb[0].mxu0 %v958
        %v960 = vpop.f32.mrb[0].mxu0
        %v961 = vadd.f32 %v536, %v960
        %v962 = vpop.f32.mrb[0].mxu0
        %v963 = vadd.f32 %v538, %v962
        %v964 = vand.u32 %v276, 4294901760
        %965 = vmatprep.mubr.f32.mxu0 %v964
        %v966 = vand.u32 %v275, 4294901760
        %967 = vmatmul.mubr.f32.gmra.mrb[0].mxu0 %v966
        %v968 = vpop.f32.mrb[0].mxu0
        %v969 = vadd.f32 %v552, %v968
        %v970 = vpop.f32.mrb[0].mxu0
        %v971 = vadd.f32 %v554, %v970
        %972 = vdwg.mxu0
        %v973 = vand.u32 %v279, 4294901760
        %v974 = vsub.f32 %v279, %v973
        %975 = vmatprep.subr.mxu0 %v974
        %v976 = vand.u32 %v278, 4294901760
        %v977 = vsub.f32 %v278, %v976
        %978 = vmatpush1.msra.mxu0 %v977
        %v979 = vand.u32 %v281, 4294901760
        %v980 = vsub.f32 %v281, %v979
        %981 = vmatprep.subr.mxu0 %v980
        %v982 = vand.u32 %v280, 4294901760
        %v983 = vsub.f32 %v280, %v982
        %984 = vmatpush1.msra.mxu0 %v983
        %v985 = vand.u32 %v283, 4294901760
        %v986 = vsub.f32 %v283, %v985
        %987 = vmatprep.subr.mxu0 %v986
        %v988 = vand.u32 %v282, 4294901760
        %v989 = vsub.f32 %v282, %v988
        %990 = vmatpush1.msra.mxu0 %v989
        %v991 = vand.u32 %v285, 4294901760
        %v992 = vsub.f32 %v285, %v991
        %993 = vmatprep.subr.mxu0 %v992
        %v994 = vand.u32 %v284, 4294901760
        %v995 = vsub.f32 %v284, %v994
        %996 = vmatpush1.msra.mxu0 %v995
        %v997 = vand.u32 %v287, 4294901760
        %v998 = vsub.f32 %v287, %v997
        %999 = vmatprep.subr.mxu0 %v998
        %v1000 = vand.u32 %v286, 4294901760
        %v1001 = vsub.f32 %v286, %v1000
        %1002 = vmatpush1.msra.mxu0 %v1001
        %v1003 = vand.u32 %v289, 4294901760
        %v1004 = vsub.f32 %v289, %v1003
        %1005 = vmatprep.subr.mxu0 %v1004
        %v1006 = vand.u32 %v288, 4294901760
        %v1007 = vsub.f32 %v288, %v1006
        %1008 = vmatpush1.msra.mxu0 %v1007
        %v1009 = vand.u32 %v291, 4294901760
        %v1010 = vsub.f32 %v291, %v1009
        %1011 = vmatprep.subr.mxu0 %v1010
        %v1012 = vand.u32 %v290, 4294901760
        %v1013 = vsub.f32 %v290, %v1012
        %1014 = vmatpush1.msra.mxu0 %v1013
        %v1015 = vand.u32 %v293, 4294901760
        %v1016 = vsub.f32 %v293, %v1015
        %1017 = vmatprep.subr.mxu0 %v1016
        %v1018 = vand.u32 %v292, 4294901760
        %v1019 = vsub.f32 %v292, %v1018
        %1020 = vmatpush1.msra.mxu0 %v1019
        %v1021 = vand.u32 %v295, 4294901760
        %v1022 = vsub.f32 %v295, %v1021
        %1023 = vmatprep.subr.mxu0 %v1022
        %v1024 = vand.u32 %v294, 4294901760
        %v1025 = vsub.f32 %v294, %v1024
        %1026 = vmatpush1.msra.mxu0 %v1025
        %v1027 = vand.u32 %v297, 4294901760
        %v1028 = vsub.f32 %v297, %v1027
        %1029 = vmatprep.subr.mxu0 %v1028
        %v1030 = vand.u32 %v296, 4294901760
        %v1031 = vsub.f32 %v296, %v1030
        %1032 = vmatpush1.msra.mxu0 %v1031
        %v1033 = vand.u32 %v299, 4294901760
        %v1034 = vsub.f32 %v299, %v1033
        %1035 = vmatprep.subr.mxu0 %v1034
        %v1036 = vand.u32 %v298, 4294901760
        %v1037 = vsub.f32 %v298, %v1036
        %1038 = vmatpush1.msra.mxu0 %v1037
        %v1039 = vand.u32 %v301, 4294901760
        %v1040 = vsub.f32 %v301, %v1039
        %1041 = vmatprep.subr.mxu0 %v1040
        %v1042 = vand.u32 %v300, 4294901760
        %v1043 = vsub.f32 %v300, %v1042
        %1044 = vmatpush1.msra.mxu0 %v1043
        %v1045 = vand.u32 %v303, 4294901760
        %v1046 = vsub.f32 %v303, %v1045
        %1047 = vmatprep.subr.mxu0 %v1046
        %v1048 = vand.u32 %v302, 4294901760
        %v1049 = vsub.f32 %v302, %v1048
        %1050 = vmatpush1.msra.mxu0 %v1049
        %v1051 = vand.u32 %v305, 4294901760
        %v1052 = vsub.f32 %v305, %v1051
        %1053 = vmatprep.subr.mxu0 %v1052
        %v1054 = vand.u32 %v304, 4294901760
        %v1055 = vsub.f32 %v304, %v1054
        %1056 = vmatpush1.msra.mxu0 %v1055
        %v1057 = vand.u32 %v307, 4294901760
        %v1058 = vsub.f32 %v307, %v1057
        %1059 = vmatprep.subr.mxu0 %v1058
        %v1060 = vand.u32 %v306, 4294901760
        %v1061 = vsub.f32 %v306, %v1060
        %1062 = vmatpush1.msra.mxu0 %v1061
        %v1063 = vand.u32 %v309, 4294901760
        %v1064 = vsub.f32 %v309, %v1063
        %1065 = vmatprep.subr.mxu0 %v1064
        %v1066 = vand.u32 %v308, 4294901760
        %v1067 = vsub.f32 %v308, %v1066
        %1068 = vmatpush1.msra.mxu0 %v1067
        %v1069 = vand.u32 %v311, 4294901760
        %v1070 = vsub.f32 %v311, %v1069
        %1071 = vmatprep.subr.mxu0 %v1070
        %v1072 = vand.u32 %v310, 4294901760
        %v1073 = vsub.f32 %v310, %v1072
        %1074 = vmatpush1.msra.mxu0 %v1073
        %v1075 = vand.u32 %v313, 4294901760
        %v1076 = vsub.f32 %v313, %v1075
        %1077 = vmatprep.subr.mxu0 %v1076
        %v1078 = vand.u32 %v312, 4294901760
        %v1079 = vsub.f32 %v312, %v1078
        %1080 = vmatpush1.msra.mxu0 %v1079
        %v1081 = vand.u32 %v315, 4294901760
        %v1082 = vsub.f32 %v315, %v1081
        %1083 = vmatprep.subr.mxu0 %v1082
        %v1084 = vand.u32 %v314, 4294901760
        %v1085 = vsub.f32 %v314, %v1084
        %1086 = vmatpush1.msra.mxu0 %v1085
        %v1087 = vand.u32 %v317, 4294901760
        %v1088 = vsub.f32 %v317, %v1087
        %1089 = vmatprep.subr.mxu0 %v1088
        %v1090 = vand.u32 %v316, 4294901760
        %v1091 = vsub.f32 %v316, %v1090
        %1092 = vmatpush1.msra.mxu0 %v1091
        %v1093 = vand.u32 %v319, 4294901760
        %v1094 = vsub.f32 %v319, %v1093
        %1095 = vmatprep.subr.mxu0 %v1094
        %v1096 = vand.u32 %v318, 4294901760
        %v1097 = vsub.f32 %v318, %v1096
        %1098 = vmatpush1.msra.mxu0 %v1097
        %v1099 = vand.u32 %v321, 4294901760
        %v1100 = vsub.f32 %v321, %v1099
        %1101 = vmatprep.subr.mxu0 %v1100
        %v1102 = vand.u32 %v320, 4294901760
        %v1103 = vsub.f32 %v320, %v1102
        %1104 = vmatpush1.msra.mxu0 %v1103
        %v1105 = vand.u32 %v323, 4294901760
        %v1106 = vsub.f32 %v323, %v1105
        %1107 = vmatprep.subr.mxu0 %v1106
        %v1108 = vand.u32 %v322, 4294901760
        %v1109 = vsub.f32 %v322, %v1108
        %1110 = vmatpush1.msra.mxu0 %v1109
        %v1111 = vand.u32 %v325, 4294901760
        %v1112 = vsub.f32 %v325, %v1111
        %1113 = vmatprep.subr.mxu0 %v1112
        %v1114 = vand.u32 %v324, 4294901760
        %v1115 = vsub.f32 %v324, %v1114
        %1116 = vmatpush1.msra.mxu0 %v1115
        %v1117 = vand.u32 %v327, 4294901760
        %v1118 = vsub.f32 %v327, %v1117
        %1119 = vmatprep.subr.mxu0 %v1118
        %v1120 = vand.u32 %v326, 4294901760
        %v1121 = vsub.f32 %v326, %v1120
        %1122 = vmatpush1.msra.mxu0 %v1121
        %v1123 = vand.u32 %v329, 4294901760
        %v1124 = vsub.f32 %v329, %v1123
        %1125 = vmatprep.subr.mxu0 %v1124
        %v1126 = vand.u32 %v328, 4294901760
        %v1127 = vsub.f32 %v328, %v1126
        %1128 = vmatpush1.msra.mxu0 %v1127
        %v1129 = vand.u32 %v331, 4294901760
        %v1130 = vsub.f32 %v331, %v1129
        %1131 = vmatprep.subr.mxu0 %v1130
        %v1132 = vand.u32 %v330, 4294901760
        %v1133 = vsub.f32 %v330, %v1132
        %1134 = vmatpush1.msra.mxu0 %v1133
        %v1135 = vand.u32 %v333, 4294901760
        %v1136 = vsub.f32 %v333, %v1135
        %1137 = vmatprep.subr.mxu0 %v1136
        %v1138 = vand.u32 %v332, 4294901760
        %v1139 = vsub.f32 %v332, %v1138
        %1140 = vmatpush1.msra.mxu0 %v1139
        %v1141 = vand.u32 %v335, 4294901760
        %v1142 = vsub.f32 %v335, %v1141
        %1143 = vmatprep.subr.mxu0 %v1142
        %v1144 = vand.u32 %v334, 4294901760
        %v1145 = vsub.f32 %v334, %v1144
        %1146 = vmatpush1.msra.mxu0 %v1145
        %v1147 = vand.u32 %v337, 4294901760
        %v1148 = vsub.f32 %v337, %v1147
        %1149 = vmatprep.subr.mxu0 %v1148
        %v1150 = vand.u32 %v336, 4294901760
        %v1151 = vsub.f32 %v336, %v1150
        %1152 = vmatpush1.msra.mxu0 %v1151
        %v1153 = vand.u32 %v339, 4294901760
        %v1154 = vsub.f32 %v339, %v1153
        %1155 = vmatprep.subr.mxu0 %v1154
        %v1156 = vand.u32 %v338, 4294901760
        %v1157 = vsub.f32 %v338, %v1156
        %1158 = vmatpush1.msra.mxu0 %v1157
        %v1159 = vand.u32 %v341, 4294901760
        %v1160 = vsub.f32 %v341, %v1159
        %1161 = vmatprep.subr.mxu0 %v1160
        %v1162 = vand.u32 %v340, 4294901760
        %v1163 = vsub.f32 %v340, %v1162
        %1164 = vmatpush1.msra.mxu0 %v1163
        %v1165 = vand.u32 %v267, 4294901760
        %v1166 = vsub.f32 %v267, %v1165
        %1167 = vmatprep.mubr.f32.mxu0 %v1166
        %v1168 = vand.u32 %v266, 4294901760
        %v1169 = vsub.f32 %v266, %v1168
        %1170 = vmatmul.mubr.f32.gmra.mrb[0].mxu0 %v1169
        %v1171 = vpop.f32.mrb[0].mxu0
        %v1172 = vadd.f32 %v945, %v1171
        %v1173 = vpop.f32.mrb[0].mxu0
        %v1174 = vadd.f32 %v947, %v1173
        %v1175 = vand.u32 %v270, 4294901760
        %v1176 = vsub.f32 %v270, %v1175
        %1177 = vmatprep.mubr.f32.mxu0 %v1176
        %v1178 = vand.u32 %v269, 4294901760
        %v1179 = vsub.f32 %v269, %v1178
        %1180 = vmatmul.mubr.f32.gmra.mrb[0].mxu0 %v1179
        %v1181 = vpop.f32.mrb[0].mxu0
        %v1182 = vadd.f32 %v953, %v1181
        %v1183 = vpop.f32.mrb[0].mxu0
        %v1184 = vadd.f32 %v955, %v1183
        %v1185 = vand.u32 %v273, 4294901760
        %v1186 = vsub.f32 %v273, %v1185
        %1187 = vmatprep.mubr.f32.mxu0 %v1186
        %v1188 = vand.u32 %v272, 4294901760
        %v1189 = vsub.f32 %v272, %v1188
        %1190 = vmatmul.mubr.f32.gmra.mrb[0].mxu0 %v1189
        %v1191 = vpop.f32.mrb[0].mxu0
        %v1192 = vadd.f32 %v961, %v1191
        %v1193 = vpop.f32.mrb[0].mxu0
        %v1194 = vadd.f32 %v963, %v1193
        %v1195 = vand.u32 %v276, 4294901760
        %v1196 = vsub.f32 %v276, %v1195
        %1197 = vmatprep.mubr.f32.mxu0 %v1196
        %v1198 = vand.u32 %v275, 4294901760
        %v1199 = vsub.f32 %v275, %v1198
        %1200 = vmatmul.mubr.f32.gmra.mrb[0].mxu0 %v1199
        %v1201 = vpop.f32.mrb[0].mxu0
        %v1202 = vadd.f32 %v969, %v1201
        %v1203 = vpop.f32.mrb[0].mxu0
        %v1204 = vadd.f32 %v971, %v1203
        %1205 = vdwg.mxu0
        %v1206 = vand.u32 %v279, 4294901760
        %1207 = vmatprep.subr.mxu0 %v1206
        %v1208 = vand.u32 %v278, 4294901760
        %1209 = vmatpush1.msra.mxu0 %v1208
        %v1210 = vand.u32 %v281, 4294901760
        %1211 = vmatprep.subr.mxu0 %v1210
        %v1212 = vand.u32 %v280, 4294901760
        %1213 = vmatpush1.msra.mxu0 %v1212
        %v1214 = vand.u32 %v283, 4294901760
        %1215 = vmatprep.subr.mxu0 %v1214
        %v1216 = vand.u32 %v282, 4294901760
        %1217 = vmatpush1.msra.mxu0 %v1216
        %v1218 = vand.u32 %v285, 4294901760
        %1219 = vmatprep.subr.mxu0 %v1218
        %v1220 = vand.u32 %v284, 4294901760
        %1221 = vmatpush1.msra.mxu0 %v1220
        %v1222 = vand.u32 %v287, 4294901760
        %1223 = vmatprep.subr.mxu0 %v1222
        %v1224 = vand.u32 %v286, 4294901760
        %1225 = vmatpush1.msra.mxu0 %v1224
        %v1226 = vand.u32 %v289, 4294901760
        %1227 = vmatprep.subr.mxu0 %v1226
        %v1228 = vand.u32 %v288, 4294901760
        %1229 = vmatpush1.msra.mxu0 %v1228
        %v1230 = vand.u32 %v291, 4294901760
        %1231 = vmatprep.subr.mxu0 %v1230
        %v1232 = vand.u32 %v290, 4294901760
        %1233 = vmatpush1.msra.mxu0 %v1232
        %v1234 = vand.u32 %v293, 4294901760
        %1235 = vmatprep.subr.mxu0 %v1234
        %v1236 = vand.u32 %v292, 4294901760
        %1237 = vmatpush1.msra.mxu0 %v1236
        %v1238 = vand.u32 %v295, 4294901760
        %1239 = vmatprep.subr.mxu0 %v1238
        %v1240 = vand.u32 %v294, 4294901760
        %1241 = vmatpush1.msra.mxu0 %v1240
        %v1242 = vand.u32 %v297, 4294901760
        %1243 = vmatprep.subr.mxu0 %v1242
        %v1244 = vand.u32 %v296, 4294901760
        %1245 = vmatpush1.msra.mxu0 %v1244
        %v1246 = vand.u32 %v299, 4294901760
        %1247 = vmatprep.subr.mxu0 %v1246
        %v1248 = vand.u32 %v298, 4294901760
        %1249 = vmatpush1.msra.mxu0 %v1248
        %v1250 = vand.u32 %v301, 4294901760
        %1251 = vmatprep.subr.mxu0 %v1250
        %v1252 = vand.u32 %v300, 4294901760
        %1253 = vmatpush1.msra.mxu0 %v1252
        %v1254 = vand.u32 %v303, 4294901760
        %1255 = vmatprep.subr.mxu0 %v1254
        %v1256 = vand.u32 %v302, 4294901760
        %1257 = vmatpush1.msra.mxu0 %v1256
        %v1258 = vand.u32 %v305, 4294901760
        %1259 = vmatprep.subr.mxu0 %v1258
        %v1260 = vand.u32 %v304, 4294901760
        %1261 = vmatpush1.msra.mxu0 %v1260
        %v1262 = vand.u32 %v307, 4294901760
        %1263 = vmatprep.subr.mxu0 %v1262
        %v1264 = vand.u32 %v306, 4294901760
        %1265 = vmatpush1.msra.mxu0 %v1264
        %v1266 = vand.u32 %v309, 4294901760
        %1267 = vmatprep.subr.mxu0 %v1266
        %v1268 = vand.u32 %v308, 4294901760
        %1269 = vmatpush1.msra.mxu0 %v1268
        %v1270 = vand.u32 %v311, 4294901760
        %1271 = vmatprep.subr.mxu0 %v1270
        %v1272 = vand.u32 %v310, 4294901760
        %1273 = vmatpush1.msra.mxu0 %v1272
        %v1274 = vand.u32 %v313, 4294901760
        %1275 = vmatprep.subr.mxu0 %v1274
        %v1276 = vand.u32 %v312, 4294901760
        %1277 = vmatpush1.msra.mxu0 %v1276
        %v1278 = vand.u32 %v315, 4294901760
        %1279 = vmatprep.subr.mxu0 %v1278
        %v1280 = vand.u32 %v314, 4294901760
        %1281 = vmatpush1.msra.mxu0 %v1280
        %v1282 = vand.u32 %v317, 4294901760
        %1283 = vmatprep.subr.mxu0 %v1282
        %v1284 = vand.u32 %v316, 4294901760
        %1285 = vmatpush1.msra.mxu0 %v1284
        %v1286 = vand.u32 %v319, 4294901760
        %1287 = vmatprep.subr.mxu0 %v1286
        %v1288 = vand.u32 %v318, 4294901760
        %1289 = vmatpush1.msra.mxu0 %v1288
        %v1290 = vand.u32 %v321, 4294901760
        %1291 = vmatprep.subr.mxu0 %v1290
        %v1292 = vand.u32 %v320, 4294901760
        %1293 = vmatpush1.msra.mxu0 %v1292
        %v1294 = vand.u32 %v323, 4294901760
        %1295 = vmatprep.subr.mxu0 %v1294
        %v1296 = vand.u32 %v322, 4294901760
        %1297 = vmatpush1.msra.mxu0 %v1296
        %v1298 = vand.u32 %v325, 4294901760
        %1299 = vmatprep.subr.mxu0 %v1298
        %v1300 = vand.u32 %v324, 4294901760
        %1301 = vmatpush1.msra.mxu0 %v1300
        %v1302 = vand.u32 %v327, 4294901760
        %1303 = vmatprep.subr.mxu0 %v1302
        %v1304 = vand.u32 %v326, 4294901760
        %1305 = vmatpush1.msra.mxu0 %v1304
        %v1306 = vand.u32 %v329, 4294901760
        %1307 = vmatprep.subr.mxu0 %v1306
        %v1308 = vand.u32 %v328, 4294901760
        %1309 = vmatpush1.msra.mxu0 %v1308
        %v1310 = vand.u32 %v331, 4294901760
        %1311 = vmatprep.subr.mxu0 %v1310
        %v1312 = vand.u32 %v330, 4294901760
        %1313 = vmatpush1.msra.mxu0 %v1312
        %v1314 = vand.u32 %v333, 4294901760
        %1315 = vmatprep.subr.mxu0 %v1314
        %v1316 = vand.u32 %v332, 4294901760
        %1317 = vmatpush1.msra.mxu0 %v1316
        %v1318 = vand.u32 %v335, 4294901760
        %1319 = vmatprep.subr.mxu0 %v1318
        %v1320 = vand.u32 %v334, 4294901760
        %1321 = vmatpush1.msra.mxu0 %v1320
        %v1322 = vand.u32 %v337, 4294901760
        %1323 = vmatprep.subr.mxu0 %v1322
        %v1324 = vand.u32 %v336, 4294901760
        %1325 = vmatpush1.msra.mxu0 %v1324
        %v1326 = vand.u32 %v339, 4294901760
        %1327 = vmatprep.subr.mxu0 %v1326
        %v1328 = vand.u32 %v338, 4294901760
        %1329 = vmatpush1.msra.mxu0 %v1328
        %v1330 = vand.u32 %v341, 4294901760
        %1331 = vmatprep.subr.mxu0 %v1330
        %v1332 = vand.u32 %v340, 4294901760
        %1333 = vmatpush1.msra.mxu0 %v1332
        %v1334 = vand.u32 %v267, 4294901760
        %v1335 = vsub.f32 %v267, %v1334
        %v1336 = vand.u32 %v1335, 4294901760
        %1337 = vmatprep.mubr.f32.mxu0 %v1336
        %v1338 = vand.u32 %v266, 4294901760
        %v1339 = vsub.f32 %v266, %v1338
        %v1340 = vand.u32 %v1339, 4294901760
        %1341 = vmatmul.mubr.f32.gmra.mrb[0].mxu0 %v1340
        %v1342 = vpop.f32.mrb[0].mxu0
        %v1343 = vadd.f32 %v1172, %v1342
        %v1344 = vpop.f32.mrb[0].mxu0
        %v1345 = vadd.f32 %v1174, %v1344
        %v1346 = vand.u32 %v270, 4294901760
        %v1347 = vsub.f32 %v270, %v1346
        %v1348 = vand.u32 %v1347, 4294901760
        %1349 = vmatprep.mubr.f32.mxu0 %v1348
        %v1350 = vand.u32 %v269, 4294901760
        %v1351 = vsub.f32 %v269, %v1350
        %v1352 = vand.u32 %v1351, 4294901760
        %1353 = vmatmul.mubr.f32.gmra.mrb[0].mxu0 %v1352
        %v1354 = vpop.f32.mrb[0].mxu0
        %v1355 = vadd.f32 %v1182, %v1354
        %v1356 = vpop.f32.mrb[0].mxu0
        %v1357 = vadd.f32 %v1184, %v1356
        %v1358 = vand.u32 %v273, 4294901760
        %v1359 = vsub.f32 %v273, %v1358
        %v1360 = vand.u32 %v1359, 4294901760
        %1361 = vmatprep.mubr.f32.mxu0 %v1360
        %v1362 = vand.u32 %v272, 4294901760
        %v1363 = vsub.f32 %v272, %v1362
        %v1364 = vand.u32 %v1363, 4294901760
        %1365 = vmatmul.mubr.f32.gmra.mrb[0].mxu0 %v1364
        %v1366 = vpop.f32.mrb[0].mxu0
        %v1367 = vadd.f32 %v1192, %v1366
        %v1368 = vpop.f32.mrb[0].mxu0
        %v1369 = vadd.f32 %v1194, %v1368
        %v1370 = vand.u32 %v276, 4294901760
        %v1371 = vsub.f32 %v276, %v1370
        %v1372 = vand.u32 %v1371, 4294901760
        %1373 = vmatprep.mubr.f32.mxu0 %v1372
        %v1374 = vand.u32 %v275, 4294901760
        %v1375 = vsub.f32 %v275, %v1374
        %v1376 = vand.u32 %v1375, 4294901760
        %1377 = vmatmul.mubr.f32.gmra.mrb[0].mxu0 %v1376
        %v1378 = vpop.f32.mrb[0].mxu0
        %v1379 = vadd.f32 %v1202, %v1378
        %v1380 = vpop.f32.mrb[0].mxu0
        %v1381 = vadd.f32 %v1204, %v1380
        %1382 = vdwg.mxu0
        %v1383 = vand.u32 %v279, 4294901760
        %v1384 = vsub.f32 %v279, %v1383
        %v1385 = vand.u32 %v1384, 4294901760
        %1386 = vmatprep.subr.mxu0 %v1385
        %v1387 = vand.u32 %v278, 4294901760
        %v1388 = vsub.f32 %v278, %v1387
        %v1389 = vand.u32 %v1388, 4294901760
        %1390 = vmatpush1.msra.mxu0 %v1389
        %v1391 = vand.u32 %v281, 4294901760
        %v1392 = vsub.f32 %v281, %v1391
        %v1393 = vand.u32 %v1392, 4294901760
        %1394 = vmatprep.subr.mxu0 %v1393
        %v1395 = vand.u32 %v280, 4294901760
        %v1396 = vsub.f32 %v280, %v1395
        %v1397 = vand.u32 %v1396, 4294901760
        %1398 = vmatpush1.msra.mxu0 %v1397
        %v1399 = vand.u32 %v283, 4294901760
        %v1400 = vsub.f32 %v283, %v1399
        %v1401 = vand.u32 %v1400, 4294901760
        %1402 = vmatprep.subr.mxu0 %v1401
        %v1403 = vand.u32 %v282, 4294901760
        %v1404 = vsub.f32 %v282, %v1403
        %v1405 = vand.u32 %v1404, 4294901760
        %1406 = vmatpush1.msra.mxu0 %v1405
        %v1407 = vand.u32 %v285, 4294901760
        %v1408 = vsub.f32 %v285, %v1407
        %v1409 = vand.u32 %v1408, 4294901760
        %1410 = vmatprep.subr.mxu0 %v1409
        %v1411 = vand.u32 %v284, 4294901760
        %v1412 = vsub.f32 %v284, %v1411
        %v1413 = vand.u32 %v1412, 4294901760
        %1414 = vmatpush1.msra.mxu0 %v1413
        %v1415 = vand.u32 %v287, 4294901760
        %v1416 = vsub.f32 %v287, %v1415
        %v1417 = vand.u32 %v1416, 4294901760
        %1418 = vmatprep.subr.mxu0 %v1417
        %v1419 = vand.u32 %v286, 4294901760
        %v1420 = vsub.f32 %v286, %v1419
        %v1421 = vand.u32 %v1420, 4294901760
        %1422 = vmatpush1.msra.mxu0 %v1421
        %v1423 = vand.u32 %v289, 4294901760
        %v1424 = vsub.f32 %v289, %v1423
        %v1425 = vand.u32 %v1424, 4294901760
        %1426 = vmatprep.subr.mxu0 %v1425
        %v1427 = vand.u32 %v288, 4294901760
        %v1428 = vsub.f32 %v288, %v1427
        %v1429 = vand.u32 %v1428, 4294901760
        %1430 = vmatpush1.msra.mxu0 %v1429
        %v1431 = vand.u32 %v291, 4294901760
        %v1432 = vsub.f32 %v291, %v1431
        %v1433 = vand.u32 %v1432, 4294901760
        %1434 = vmatprep.subr.mxu0 %v1433
        %v1435 = vand.u32 %v290, 4294901760
        %v1436 = vsub.f32 %v290, %v1435
        %v1437 = vand.u32 %v1436, 4294901760
        %1438 = vmatpush1.msra.mxu0 %v1437
        %v1439 = vand.u32 %v293, 4294901760
        %v1440 = vsub.f32 %v293, %v1439
        %v1441 = vand.u32 %v1440, 4294901760
        %1442 = vmatprep.subr.mxu0 %v1441
        %v1443 = vand.u32 %v292, 4294901760
        %v1444 = vsub.f32 %v292, %v1443
        %v1445 = vand.u32 %v1444, 4294901760
        %1446 = vmatpush1.msra.mxu0 %v1445
        %v1447 = vand.u32 %v295, 4294901760
        %v1448 = vsub.f32 %v295, %v1447
        %v1449 = vand.u32 %v1448, 4294901760
        %1450 = vmatprep.subr.mxu0 %v1449
        %v1451 = vand.u32 %v294, 4294901760
        %v1452 = vsub.f32 %v294, %v1451
        %v1453 = vand.u32 %v1452, 4294901760
        %1454 = vmatpush1.msra.mxu0 %v1453
        %v1455 = vand.u32 %v297, 4294901760
        %v1456 = vsub.f32 %v297, %v1455
        %v1457 = vand.u32 %v1456, 4294901760
        %1458 = vmatprep.subr.mxu0 %v1457
        %v1459 = vand.u32 %v296, 4294901760
        %v1460 = vsub.f32 %v296, %v1459
        %v1461 = vand.u32 %v1460, 4294901760
        %1462 = vmatpush1.msra.mxu0 %v1461
        %v1463 = vand.u32 %v299, 4294901760
        %v1464 = vsub.f32 %v299, %v1463
        %v1465 = vand.u32 %v1464, 4294901760
        %1466 = vmatprep.subr.mxu0 %v1465
        %v1467 = vand.u32 %v298, 4294901760
        %v1468 = vsub.f32 %v298, %v1467
        %v1469 = vand.u32 %v1468, 4294901760
        %1470 = vmatpush1.msra.mxu0 %v1469
        %v1471 = vand.u32 %v301, 4294901760
        %v1472 = vsub.f32 %v301, %v1471
        %v1473 = vand.u32 %v1472, 4294901760
        %1474 = vmatprep.subr.mxu0 %v1473
        %v1475 = vand.u32 %v300, 4294901760
        %v1476 = vsub.f32 %v300, %v1475
        %v1477 = vand.u32 %v1476, 4294901760
        %1478 = vmatpush1.msra.mxu0 %v1477
        %v1479 = vand.u32 %v303, 4294901760
        %v1480 = vsub.f32 %v303, %v1479
        %v1481 = vand.u32 %v1480, 4294901760
        %1482 = vmatprep.subr.mxu0 %v1481
        %v1483 = vand.u32 %v302, 4294901760
        %v1484 = vsub.f32 %v302, %v1483
        %v1485 = vand.u32 %v1484, 4294901760
        %1486 = vmatpush1.msra.mxu0 %v1485
        %v1487 = vand.u32 %v305, 4294901760
        %v1488 = vsub.f32 %v305, %v1487
        %v1489 = vand.u32 %v1488, 4294901760
        %1490 = vmatprep.subr.mxu0 %v1489
        %v1491 = vand.u32 %v304, 4294901760
        %v1492 = vsub.f32 %v304, %v1491
        %v1493 = vand.u32 %v1492, 4294901760
        %1494 = vmatpush1.msra.mxu0 %v1493
        %v1495 = vand.u32 %v307, 4294901760
        %v1496 = vsub.f32 %v307, %v1495
        %v1497 = vand.u32 %v1496, 4294901760
        %1498 = vmatprep.subr.mxu0 %v1497
        %v1499 = vand.u32 %v306, 4294901760
        %v1500 = vsub.f32 %v306, %v1499
        %v1501 = vand.u32 %v1500, 4294901760
        %1502 = vmatpush1.msra.mxu0 %v1501
        %v1503 = vand.u32 %v309, 4294901760
        %v1504 = vsub.f32 %v309, %v1503
        %v1505 = vand.u32 %v1504, 4294901760
        %1506 = vmatprep.subr.mxu0 %v1505
        %v1507 = vand.u32 %v308, 4294901760
        %v1508 = vsub.f32 %v308, %v1507
        %v1509 = vand.u32 %v1508, 4294901760
        %1510 = vmatpush1.msra.mxu0 %v1509
        %v1511 = vand.u32 %v311, 4294901760
        %v1512 = vsub.f32 %v311, %v1511
        %v1513 = vand.u32 %v1512, 4294901760
        %1514 = vmatprep.subr.mxu0 %v1513
        %v1515 = vand.u32 %v310, 4294901760
        %v1516 = vsub.f32 %v310, %v1515
        %v1517 = vand.u32 %v1516, 4294901760
        %1518 = vmatpush1.msra.mxu0 %v1517
        %v1519 = vand.u32 %v313, 4294901760
        %v1520 = vsub.f32 %v313, %v1519
        %v1521 = vand.u32 %v1520, 4294901760
        %1522 = vmatprep.subr.mxu0 %v1521
        %v1523 = vand.u32 %v312, 4294901760
        %v1524 = vsub.f32 %v312, %v1523
        %v1525 = vand.u32 %v1524, 4294901760
        %1526 = vmatpush1.msra.mxu0 %v1525
        %v1527 = vand.u32 %v315, 4294901760
        %v1528 = vsub.f32 %v315, %v1527
        %v1529 = vand.u32 %v1528, 4294901760
        %1530 = vmatprep.subr.mxu0 %v1529
        %v1531 = vand.u32 %v314, 4294901760
        %v1532 = vsub.f32 %v314, %v1531
        %v1533 = vand.u32 %v1532, 4294901760
        %1534 = vmatpush1.msra.mxu0 %v1533
        %v1535 = vand.u32 %v317, 4294901760
        %v1536 = vsub.f32 %v317, %v1535
        %v1537 = vand.u32 %v1536, 4294901760
        %1538 = vmatprep.subr.mxu0 %v1537
        %v1539 = vand.u32 %v316, 4294901760
        %v1540 = vsub.f32 %v316, %v1539
        %v1541 = vand.u32 %v1540, 4294901760
        %1542 = vmatpush1.msra.mxu0 %v1541
        %v1543 = vand.u32 %v319, 4294901760
        %v1544 = vsub.f32 %v319, %v1543
        %v1545 = vand.u32 %v1544, 4294901760
        %1546 = vmatprep.subr.mxu0 %v1545
        %v1547 = vand.u32 %v318, 4294901760
        %v1548 = vsub.f32 %v318, %v1547
        %v1549 = vand.u32 %v1548, 4294901760
        %1550 = vmatpush1.msra.mxu0 %v1549
        %v1551 = vand.u32 %v321, 4294901760
        %v1552 = vsub.f32 %v321, %v1551
        %v1553 = vand.u32 %v1552, 4294901760
        %1554 = vmatprep.subr.mxu0 %v1553
        %v1555 = vand.u32 %v320, 4294901760
        %v1556 = vsub.f32 %v320, %v1555
        %v1557 = vand.u32 %v1556, 4294901760
        %1558 = vmatpush1.msra.mxu0 %v1557
        %v1559 = vand.u32 %v323, 4294901760
        %v1560 = vsub.f32 %v323, %v1559
        %v1561 = vand.u32 %v1560, 4294901760
        %1562 = vmatprep.subr.mxu0 %v1561
        %v1563 = vand.u32 %v322, 4294901760
        %v1564 = vsub.f32 %v322, %v1563
        %v1565 = vand.u32 %v1564, 4294901760
        %1566 = vmatpush1.msra.mxu0 %v1565
        %v1567 = vand.u32 %v325, 4294901760
        %v1568 = vsub.f32 %v325, %v1567
        %v1569 = vand.u32 %v1568, 4294901760
        %1570 = vmatprep.subr.mxu0 %v1569
        %v1571 = vand.u32 %v324, 4294901760
        %v1572 = vsub.f32 %v324, %v1571
        %v1573 = vand.u32 %v1572, 4294901760
        %1574 = vmatpush1.msra.mxu0 %v1573
        %v1575 = vand.u32 %v327, 4294901760
        %v1576 = vsub.f32 %v327, %v1575
        %v1577 = vand.u32 %v1576, 4294901760
        %1578 = vmatprep.subr.mxu0 %v1577
        %v1579 = vand.u32 %v326, 4294901760
        %v1580 = vsub.f32 %v326, %v1579
        %v1581 = vand.u32 %v1580, 4294901760
        %1582 = vmatpush1.msra.mxu0 %v1581
        %v1583 = vand.u32 %v329, 4294901760
        %v1584 = vsub.f32 %v329, %v1583
        %v1585 = vand.u32 %v1584, 4294901760
        %1586 = vmatprep.subr.mxu0 %v1585
        %v1587 = vand.u32 %v328, 4294901760
        %v1588 = vsub.f32 %v328, %v1587
        %v1589 = vand.u32 %v1588, 4294901760
        %1590 = vmatpush1.msra.mxu0 %v1589
        %v1591 = vand.u32 %v331, 4294901760
        %v1592 = vsub.f32 %v331, %v1591
        %v1593 = vand.u32 %v1592, 4294901760
        %1594 = vmatprep.subr.mxu0 %v1593
        %v1595 = vand.u32 %v330, 4294901760
        %v1596 = vsub.f32 %v330, %v1595
        %v1597 = vand.u32 %v1596, 4294901760
        %1598 = vmatpush1.msra.mxu0 %v1597
        %v1599 = vand.u32 %v333, 4294901760
        %v1600 = vsub.f32 %v333, %v1599
        %v1601 = vand.u32 %v1600, 4294901760
        %1602 = vmatprep.subr.mxu0 %v1601
        %v1603 = vand.u32 %v332, 4294901760
        %v1604 = vsub.f32 %v332, %v1603
        %v1605 = vand.u32 %v1604, 4294901760
        %1606 = vmatpush1.msra.mxu0 %v1605
        %v1607 = vand.u32 %v335, 4294901760
        %v1608 = vsub.f32 %v335, %v1607
        %v1609 = vand.u32 %v1608, 4294901760
        %1610 = vmatprep.subr.mxu0 %v1609
        %v1611 = vand.u32 %v334, 4294901760
        %v1612 = vsub.f32 %v334, %v1611
        %v1613 = vand.u32 %v1612, 4294901760
        %1614 = vmatpush1.msra.mxu0 %v1613
        %v1615 = vand.u32 %v337, 4294901760
        %v1616 = vsub.f32 %v337, %v1615
        %v1617 = vand.u32 %v1616, 4294901760
        %1618 = vmatprep.subr.mxu0 %v1617
        %v1619 = vand.u32 %v336, 4294901760
        %v1620 = vsub.f32 %v336, %v1619
        %v1621 = vand.u32 %v1620, 4294901760
        %1622 = vmatpush1.msra.mxu0 %v1621
        %v1623 = vand.u32 %v339, 4294901760
        %v1624 = vsub.f32 %v339, %v1623
        %v1625 = vand.u32 %v1624, 4294901760
        %1626 = vmatprep.subr.mxu0 %v1625
        %v1627 = vand.u32 %v338, 4294901760
        %v1628 = vsub.f32 %v338, %v1627
        %v1629 = vand.u32 %v1628, 4294901760
        %1630 = vmatpush1.msra.mxu0 %v1629
        %v1631 = vand.u32 %v341, 4294901760
        %v1632 = vsub.f32 %v341, %v1631
        %v1633 = vand.u32 %v1632, 4294901760
        %1634 = vmatprep.subr.mxu0 %v1633
        %v1635 = vand.u32 %v340, 4294901760
        %v1636 = vsub.f32 %v340, %v1635
        %v1637 = vand.u32 %v1636, 4294901760
        %1638 = vmatpush1.msra.mxu0 %v1637
        %v1639 = vand.u32 %v267, 4294901760
        %1640 = vmatprep.mubr.f32.mxu0 %v1639
        %v1641 = vand.u32 %v266, 4294901760
        %1642 = vmatmul.mubr.f32.gmra.mrb[0].mxu0 %v1641
        %v1643 = vpop.f32.mrb[0].mxu0
        %v1644 = vadd.f32 %v1343, %v1643
        %v1645 = vpop.f32.mrb[0].mxu0
        %v1646 = vadd.f32 %v1345, %v1645
        %v1647 = vand.u32 %v270, 4294901760
        %1648 = vmatprep.mubr.f32.mxu0 %v1647
        %v1649 = vand.u32 %v269, 4294901760
        %1650 = vmatmul.mubr.f32.gmra.mrb[0].mxu0 %v1649
        %v1651 = vpop.f32.mrb[0].mxu0
        %v1652 = vadd.f32 %v1355, %v1651
        %v1653 = vpop.f32.mrb[0].mxu0
        %v1654 = vadd.f32 %v1357, %v1653
        %v1655 = vand.u32 %v273, 4294901760
        %1656 = vmatprep.mubr.f32.mxu0 %v1655
        %v1657 = vand.u32 %v272, 4294901760
        %1658 = vmatmul.mubr.f32.gmra.mrb[0].mxu0 %v1657
        %v1659 = vpop.f32.mrb[0].mxu0
        %v1660 = vadd.f32 %v1367, %v1659
        %v1661 = vpop.f32.mrb[0].mxu0
        %v1662 = vadd.f32 %v1369, %v1661
        %v1663 = vand.u32 %v276, 4294901760
        %1664 = vmatprep.mubr.f32.mxu0 %v1663
        %v1665 = vand.u32 %v275, 4294901760
        %1666 = vmatmul.mubr.f32.gmra.mrb[0].mxu0 %v1665
        %v1667 = vpop.f32.mrb[0].mxu0
        %v1668 = vadd.f32 %v1379, %v1667
        %v1669 = vpop.f32.mrb[0].mxu0
        %v1670 = vadd.f32 %v1381, %v1669
        %1671 = vdwg.mxu0
        %v1672 = vand.u32 %v279, 4294901760
        %1673 = vmatprep.subr.mxu0 %v1672
        %v1674 = vand.u32 %v278, 4294901760
        %1675 = vmatpush1.msra.mxu0 %v1674
        %v1676 = vand.u32 %v281, 4294901760
        %1677 = vmatprep.subr.mxu0 %v1676
        %v1678 = vand.u32 %v280, 4294901760
        %1679 = vmatpush1.msra.mxu0 %v1678
        %v1680 = vand.u32 %v283, 4294901760
        %1681 = vmatprep.subr.mxu0 %v1680
        %v1682 = vand.u32 %v282, 4294901760
        %1683 = vmatpush1.msra.mxu0 %v1682
        %v1684 = vand.u32 %v285, 4294901760
        %1685 = vmatprep.subr.mxu0 %v1684
        %v1686 = vand.u32 %v284, 4294901760
        %1687 = vmatpush1.msra.mxu0 %v1686
        %v1688 = vand.u32 %v287, 4294901760
        %1689 = vmatprep.subr.mxu0 %v1688
        %v1690 = vand.u32 %v286, 4294901760
        %1691 = vmatpush1.msra.mxu0 %v1690
        %v1692 = vand.u32 %v289, 4294901760
        %1693 = vmatprep.subr.mxu0 %v1692
        %v1694 = vand.u32 %v288, 4294901760
        %1695 = vmatpush1.msra.mxu0 %v1694
        %v1696 = vand.u32 %v291, 4294901760
        %1697 = vmatprep.subr.mxu0 %v1696
        %v1698 = vand.u32 %v290, 4294901760
        %1699 = vmatpush1.msra.mxu0 %v1698
        %v1700 = vand.u32 %v293, 4294901760
        %1701 = vmatprep.subr.mxu0 %v1700
        %v1702 = vand.u32 %v292, 4294901760
        %1703 = vmatpush1.msra.mxu0 %v1702
        %v1704 = vand.u32 %v295, 4294901760
        %1705 = vmatprep.subr.mxu0 %v1704
        %v1706 = vand.u32 %v294, 4294901760
        %1707 = vmatpush1.msra.mxu0 %v1706
        %v1708 = vand.u32 %v297, 4294901760
        %1709 = vmatprep.subr.mxu0 %v1708
        %v1710 = vand.u32 %v296, 4294901760
        %1711 = vmatpush1.msra.mxu0 %v1710
        %v1712 = vand.u32 %v299, 4294901760
        %1713 = vmatprep.subr.mxu0 %v1712
        %v1714 = vand.u32 %v298, 4294901760
        %1715 = vmatpush1.msra.mxu0 %v1714
        %v1716 = vand.u32 %v301, 4294901760
        %1717 = vmatprep.subr.mxu0 %v1716
        %v1718 = vand.u32 %v300, 4294901760
        %1719 = vmatpush1.msra.mxu0 %v1718
        %v1720 = vand.u32 %v303, 4294901760
        %1721 = vmatprep.subr.mxu0 %v1720
        %v1722 = vand.u32 %v302, 4294901760
        %1723 = vmatpush1.msra.mxu0 %v1722
        %v1724 = vand.u32 %v305, 4294901760
        %1725 = vmatprep.subr.mxu0 %v1724
        %v1726 = vand.u32 %v304, 4294901760
        %1727 = vmatpush1.msra.mxu0 %v1726
        %v1728 = vand.u32 %v307, 4294901760
        %1729 = vmatprep.subr.mxu0 %v1728
        %v1730 = vand.u32 %v306, 4294901760
        %1731 = vmatpush1.msra.mxu0 %v1730
        %v1732 = vand.u32 %v309, 4294901760
        %1733 = vmatprep.subr.mxu0 %v1732
        %v1734 = vand.u32 %v308, 4294901760
        %1735 = vmatpush1.msra.mxu0 %v1734
        %v1736 = vand.u32 %v311, 4294901760
        %1737 = vmatprep.subr.mxu0 %v1736
        %v1738 = vand.u32 %v310, 4294901760
        %1739 = vmatpush1.msra.mxu0 %v1738
        %v1740 = vand.u32 %v313, 4294901760
        %1741 = vmatprep.subr.mxu0 %v1740
        %v1742 = vand.u32 %v312, 4294901760
        %1743 = vmatpush1.msra.mxu0 %v1742
        %v1744 = vand.u32 %v315, 4294901760
        %1745 = vmatprep.subr.mxu0 %v1744
        %v1746 = vand.u32 %v314, 4294901760
        %1747 = vmatpush1.msra.mxu0 %v1746
        %v1748 = vand.u32 %v317, 4294901760
        %1749 = vmatprep.subr.mxu0 %v1748
        %v1750 = vand.u32 %v316, 4294901760
        %1751 = vmatpush1.msra.mxu0 %v1750
        %v1752 = vand.u32 %v319, 4294901760
        %1753 = vmatprep.subr.mxu0 %v1752
        %v1754 = vand.u32 %v318, 4294901760
        %1755 = vmatpush1.msra.mxu0 %v1754
        %v1756 = vand.u32 %v321, 4294901760
        %1757 = vmatprep.subr.mxu0 %v1756
        %v1758 = vand.u32 %v320, 4294901760
        %1759 = vmatpush1.msra.mxu0 %v1758
        %v1760 = vand.u32 %v323, 4294901760
        %1761 = vmatprep.subr.mxu0 %v1760
        %v1762 = vand.u32 %v322, 4294901760
        %1763 = vmatpush1.msra.mxu0 %v1762
        %v1764 = vand.u32 %v325, 4294901760
        %1765 = vmatprep.subr.mxu0 %v1764
        %v1766 = vand.u32 %v324, 4294901760
        %1767 = vmatpush1.msra.mxu0 %v1766
        %v1768 = vand.u32 %v327, 4294901760
        %1769 = vmatprep.subr.mxu0 %v1768
        %v1770 = vand.u32 %v326, 4294901760
        %1771 = vmatpush1.msra.mxu0 %v1770
        %v1772 = vand.u32 %v329, 4294901760
        %1773 = vmatprep.subr.mxu0 %v1772
        %v1774 = vand.u32 %v328, 4294901760
        %1775 = vmatpush1.msra.mxu0 %v1774
        %v1776 = vand.u32 %v331, 4294901760
        %1777 = vmatprep.subr.mxu0 %v1776
        %v1778 = vand.u32 %v330, 4294901760
        %1779 = vmatpush1.msra.mxu0 %v1778
        %v1780 = vand.u32 %v333, 4294901760
        %1781 = vmatprep.subr.mxu0 %v1780
        %v1782 = vand.u32 %v332, 4294901760
        %1783 = vmatpush1.msra.mxu0 %v1782
        %v1784 = vand.u32 %v335, 4294901760
        %1785 = vmatprep.subr.mxu0 %v1784
        %v1786 = vand.u32 %v334, 4294901760
        %1787 = vmatpush1.msra.mxu0 %v1786
        %v1788 = vand.u32 %v337, 4294901760
        %1789 = vmatprep.subr.mxu0 %v1788
        %v1790 = vand.u32 %v336, 4294901760
        %1791 = vmatpush1.msra.mxu0 %v1790
        %v1792 = vand.u32 %v339, 4294901760
        %1793 = vmatprep.subr.mxu0 %v1792
        %v1794 = vand.u32 %v338, 4294901760
        %1795 = vmatpush1.msra.mxu0 %v1794
        %v1796 = vand.u32 %v341, 4294901760
        %1797 = vmatprep.subr.mxu0 %v1796
        %v1798 = vand.u32 %v340, 4294901760
        %1799 = vmatpush1.msra.mxu0 %v1798
        %v1800 = vand.u32 %v267, 4294901760
        %1801 = vmatprep.mubr.f32.mxu0 %v1800
        %v1802 = vand.u32 %v266, 4294901760
        %1803 = vmatmul.mubr.f32.gmra.mrb[0].mxu0 %v1802
        %v1804 = vpop.f32.mrb[0].mxu0
        %v1805 = vadd.f32 %v1644, %v1804
        %v1806 = vpop.f32.mrb[0].mxu0
        %v1807 = vadd.f32 %v1646, %v1806
        %v1808 = vand.u32 %v270, 4294901760
        %1809 = vmatprep.mubr.f32.mxu0 %v1808
        %v1810 = vand.u32 %v269, 4294901760
        %1811 = vmatmul.mubr.f32.gmra.mrb[0].mxu0 %v1810
        %v1812 = vpop.f32.mrb[0].mxu0
        %v1813 = vadd.f32 %v1652, %v1812
        %v1814 = vpop.f32.mrb[0].mxu0
        %v1815 = vadd.f32 %v1654, %v1814
        %v1816 = vand.u32 %v273, 4294901760
        %1817 = vmatprep.mubr.f32.mxu0 %v1816
        %v1818 = vand.u32 %v272, 4294901760
        %1819 = vmatmul.mubr.f32.gmra.mrb[0].mxu0 %v1818
        %v1820 = vpop.f32.mrb[0].mxu0
        %v1821 = vadd.f32 %v1660, %v1820
        %v1822 = vpop.f32.mrb[0].mxu0
        %v1823 = vadd.f32 %v1662, %v1822
        %v1824 = vand.u32 %v276, 4294901760
        %1825 = vmatprep.mubr.f32.mxu0 %v1824
        %v1826 = vand.u32 %v275, 4294901760
        %1827 = vmatmul.mubr.f32.gmra.mrb[0].mxu0 %v1826
        %v1828 = vpop.f32.mrb[0].mxu0
        %v1829 = vadd.f32 %v1668, %v1828
        %v1830 = vpop.f32.mrb[0].mxu0
        %v1831 = vadd.f32 %v1670, %v1830
        %1832 = vdwg.mxu0
        %v1833 = vand.u32 %v343, 4294901760
        %1834 = vmatprep.subr.mxu0 %v1833
        %v1835 = vand.u32 %v342, 4294901760
        %1836 = vmatpush1.msra.mxu0 %v1835
        %v1837 = vand.u32 %v345, 4294901760
        %1838 = vmatprep.subr.mxu0 %v1837
        %v1839 = vand.u32 %v344, 4294901760
        %1840 = vmatpush1.msra.mxu0 %v1839
        %v1841 = vand.u32 %v347, 4294901760
        %1842 = vmatprep.subr.mxu0 %v1841
        %v1843 = vand.u32 %v346, 4294901760
        %1844 = vmatpush1.msra.mxu0 %v1843
        %v1845 = vand.u32 %v349, 4294901760
        %1846 = vmatprep.subr.mxu0 %v1845
        %v1847 = vand.u32 %v348, 4294901760
        %1848 = vmatpush1.msra.mxu0 %v1847
        %1849 = vmatprep.subr.mxu0 0.0
        %1850 = vmatpush1.msra.mxu0 0.0
        %1851 = vmatprep.subr.mxu0 0.0
        %1852 = vmatpush1.msra.mxu0 0.0
        %1853 = vmatprep.subr.mxu0 0.0
        %1854 = vmatpush1.msra.mxu0 0.0
        %1855 = vmatprep.subr.mxu0 0.0
        %1856 = vmatpush1.msra.mxu0 0.0
        %1857 = vmatprep.subr.mxu0 0.0
        %1858 = vmatpush1.msra.mxu0 0.0
        %1859 = vmatprep.subr.mxu0 0.0
        %1860 = vmatpush1.msra.mxu0 0.0
        %1861 = vmatprep.subr.mxu0 0.0
        %1862 = vmatpush1.msra.mxu0 0.0
        %1863 = vmatprep.subr.mxu0 0.0
        %1864 = vmatpush1.msra.mxu0 0.0
        %1865 = vmatprep.subr.mxu0 0.0
        %1866 = vmatpush1.msra.mxu0 0.0
        %1867 = vmatprep.subr.mxu0 0.0
        %1868 = vmatpush1.msra.mxu0 0.0
        %1869 = vmatprep.subr.mxu0 0.0
        %1870 = vmatpush1.msra.mxu0 0.0
        %1871 = vmatprep.subr.mxu0 0.0
        %1872 = vmatpush1.msra.mxu0 0.0
        %1873 = vmatprep.subr.mxu0 0.0
        %1874 = vmatpush1.msra.mxu0 0.0
        %1875 = vmatprep.subr.mxu0 0.0
        %1876 = vmatpush1.msra.mxu0 0.0
        %1877 = vmatprep.subr.mxu0 0.0
        %1878 = vmatpush1.msra.mxu0 0.0
        %1879 = vmatprep.subr.mxu0 0.0
        %1880 = vmatpush1.msra.mxu0 0.0
        %1881 = vmatprep.subr.mxu0 0.0
        %1882 = vmatpush1.msra.mxu0 0.0
        %1883 = vmatprep.subr.mxu0 0.0
        %1884 = vmatpush1.msra.mxu0 0.0
        %1885 = vmatprep.subr.mxu0 0.0
        %1886 = vmatpush1.msra.mxu0 0.0
        %1887 = vmatprep.subr.mxu0 0.0
        %1888 = vmatpush1.msra.mxu0 0.0
        %1889 = vmatprep.subr.mxu0 0.0
        %1890 = vmatpush1.msra.mxu0 0.0
        %1891 = vmatprep.subr.mxu0 0.0
        %1892 = vmatpush1.msra.mxu0 0.0
        %1893 = vmatprep.subr.mxu0 0.0
        %1894 = vmatpush1.msra.mxu0 0.0
        %1895 = vmatprep.subr.mxu0 0.0
        %1896 = vmatpush1.msra.mxu0 0.0
        %1897 = vmatprep.subr.mxu0 0.0
        %1898 = vmatpush1.msra.mxu0 0.0
        %1899 = vmatprep.subr.mxu0 0.0
        %1900 = vmatpush1.msra.mxu0 0.0
        %1901 = vmatprep.subr.mxu0 0.0
        %1902 = vmatpush1.msra.mxu0 0.0
        %1903 = vmatprep.subr.mxu0 0.0
        %1904 = vmatpush1.msra.mxu0 0.0
        %1905 = vmatprep.mubr.f32.mxu0 0.0
        %v1906 = vand.u32 %v352, 4294901760
        %v1907 = vsub.f32 %v352, %v1906
        %v1908 = vand.u32 %v1907, 4294901760
        %v1909 = vsub.f32 %v1907, %v1908
        %v1910 = vand.u32 %v1909, 4294901760
        %1911 = vmatmul.mubr.f32.gmra.mrb[0].mxu0 %v1910
        %v1912 = vpop.f32.mrb[0].mxu0
        %v1913 = vadd.f32 %v1805, %v1912
        %v1914 = vpop.f32.mrb[0].mxu0
        %v1915 = vadd.f32 %v1807, %v1914
        %1916 = vmatprep.mubr.f32.mxu0 0.0
        %v1917 = vand.u32 %v355, 4294901760
        %v1918 = vsub.f32 %v355, %v1917
        %v1919 = vand.u32 %v1918, 4294901760
        %v1920 = vsub.f32 %v1918, %v1919
        %v1921 = vand.u32 %v1920, 4294901760
        %1922 = vmatmul.mubr.f32.gmra.mrb[0].mxu0 %v1921
        %v1923 = vpop.f32.mrb[0].mxu0
        %v1924 = vadd.f32 %v1813, %v1923
        %v1925 = vpop.f32.mrb[0].mxu0
        %v1926 = vadd.f32 %v1815, %v1925
        %1927 = vmatprep.mubr.f32.mxu0 0.0
        %v1928 = vand.u32 %v358, 4294901760
        %v1929 = vsub.f32 %v358, %v1928
        %v1930 = vand.u32 %v1929, 4294901760
        %v1931 = vsub.f32 %v1929, %v1930
        %v1932 = vand.u32 %v1931, 4294901760
        %1933 = vmatmul.mubr.f32.gmra.mrb[0].mxu0 %v1932
        %v1934 = vpop.f32.mrb[0].mxu0
        %v1935 = vadd.f32 %v1821, %v1934
        %v1936 = vpop.f32.mrb[0].mxu0
        %v1937 = vadd.f32 %v1823, %v1936
        %1938 = vmatprep.mubr.f32.mxu0 0.0
        %v1939 = vand.u32 %v361, 4294901760
        %v1940 = vsub.f32 %v361, %v1939
        %v1941 = vand.u32 %v1940, 4294901760
        %v1942 = vsub.f32 %v1940, %v1941
        %v1943 = vand.u32 %v1942, 4294901760
        %1944 = vmatmul.mubr.f32.gmra.mrb[0].mxu0 %v1943
        %v1945 = vpop.f32.mrb[0].mxu0
        %v1946 = vadd.f32 %v1829, %v1945
        %v1947 = vpop.f32.mrb[0].mxu0
        %v1948 = vadd.f32 %v1831, %v1947
        %1949 = vdwg.mxu0
        %v1950 = vand.u32 %v343, 4294901760
        %v1951 = vsub.f32 %v343, %v1950
        %v1952 = vand.u32 %v1951, 4294901760
        %v1953 = vsub.f32 %v1951, %v1952
        %v1954 = vand.u32 %v1953, 4294901760
        %1955 = vmatprep.subr.mxu0 %v1954
        %v1956 = vand.u32 %v342, 4294901760
        %v1957 = vsub.f32 %v342, %v1956
        %v1958 = vand.u32 %v1957, 4294901760
        %v1959 = vsub.f32 %v1957, %v1958
        %v1960 = vand.u32 %v1959, 4294901760
        %1961 = vmatpush1.msra.mxu0 %v1960
        %v1962 = vand.u32 %v345, 4294901760
        %v1963 = vsub.f32 %v345, %v1962
        %v1964 = vand.u32 %v1963, 4294901760
        %v1965 = vsub.f32 %v1963, %v1964
        %v1966 = vand.u32 %v1965, 4294901760
        %1967 = vmatprep.subr.mxu0 %v1966
        %v1968 = vand.u32 %v344, 4294901760
        %v1969 = vsub.f32 %v344, %v1968
        %v1970 = vand.u32 %v1969, 4294901760
        %v1971 = vsub.f32 %v1969, %v1970
        %v1972 = vand.u32 %v1971, 4294901760
        %1973 = vmatpush1.msra.mxu0 %v1972
        %v1974 = vand.u32 %v347, 4294901760
        %v1975 = vsub.f32 %v347, %v1974
        %v1976 = vand.u32 %v1975, 4294901760
        %v1977 = vsub.f32 %v1975, %v1976
        %v1978 = vand.u32 %v1977, 4294901760
        %1979 = vmatprep.subr.mxu0 %v1978
        %v1980 = vand.u32 %v346, 4294901760
        %v1981 = vsub.f32 %v346, %v1980
        %v1982 = vand.u32 %v1981, 4294901760
        %v1983 = vsub.f32 %v1981, %v1982
        %v1984 = vand.u32 %v1983, 4294901760
        %1985 = vmatpush1.msra.mxu0 %v1984
        %v1986 = vand.u32 %v349, 4294901760
        %v1987 = vsub.f32 %v349, %v1986
        %v1988 = vand.u32 %v1987, 4294901760
        %v1989 = vsub.f32 %v1987, %v1988
        %v1990 = vand.u32 %v1989, 4294901760
        %1991 = vmatprep.subr.mxu0 %v1990
        %v1992 = vand.u32 %v348, 4294901760
        %v1993 = vsub.f32 %v348, %v1992
        %v1994 = vand.u32 %v1993, 4294901760
        %v1995 = vsub.f32 %v1993, %v1994
        %v1996 = vand.u32 %v1995, 4294901760
        %1997 = vmatpush1.msra.mxu0 %v1996
        %1998 = vmatprep.subr.mxu0 0.0
        %1999 = vmatpush1.msra.mxu0 0.0
        %2000 = vmatprep.subr.mxu0 0.0
        %2001 = vmatpush1.msra.mxu0 0.0
        %2002 = vmatprep.subr.mxu0 0.0
        %2003 = vmatpush1.msra.mxu0 0.0
        %2004 = vmatprep.subr.mxu0 0.0
        %2005 = vmatpush1.msra.mxu0 0.0
        %2006 = vmatprep.subr.mxu0 0.0
        %2007 = vmatpush1.msra.mxu0 0.0
        %2008 = vmatprep.subr.mxu0 0.0
        %2009 = vmatpush1.msra.mxu0 0.0
        %2010 = vmatprep.subr.mxu0 0.0
        %2011 = vmatpush1.msra.mxu0 0.0
        %2012 = vmatprep.subr.mxu0 0.0
        %2013 = vmatpush1.msra.mxu0 0.0
        %2014 = vmatprep.subr.mxu0 0.0
        %2015 = vmatpush1.msra.mxu0 0.0
        %2016 = vmatprep.subr.mxu0 0.0
        %2017 = vmatpush1.msra.mxu0 0.0
        %2018 = vmatprep.subr.mxu0 0.0
        %2019 = vmatpush1.msra.mxu0 0.0
        %2020 = vmatprep.subr.mxu0 0.0
        %2021 = vmatpush1.msra.mxu0 0.0
        %2022 = vmatprep.subr.mxu0 0.0
        %2023 = vmatpush1.msra.mxu0 0.0
        %2024 = vmatprep.subr.mxu0 0.0
        %2025 = vmatpush1.msra.mxu0 0.0
        %2026 = vmatprep.subr.mxu0 0.0
        %2027 = vmatpush1.msra.mxu0 0.0
        %2028 = vmatprep.subr.mxu0 0.0
        %2029 = vmatpush1.msra.mxu0 0.0
        %2030 = vmatprep.subr.mxu0 0.0
        %2031 = vmatpush1.msra.mxu0 0.0
        %2032 = vmatprep.subr.mxu0 0.0
        %2033 = vmatpush1.msra.mxu0 0.0
        %2034 = vmatprep.subr.mxu0 0.0
        %2035 = vmatpush1.msra.mxu0 0.0
        %2036 = vmatprep.subr.mxu0 0.0
        %2037 = vmatpush1.msra.mxu0 0.0
        %2038 = vmatprep.subr.mxu0 0.0
        %2039 = vmatpush1.msra.mxu0 0.0
        %2040 = vmatprep.subr.mxu0 0.0
        %2041 = vmatpush1.msra.mxu0 0.0
        %2042 = vmatprep.subr.mxu0 0.0
        %2043 = vmatpush1.msra.mxu0 0.0
        %2044 = vmatprep.subr.mxu0 0.0
        %2045 = vmatpush1.msra.mxu0 0.0
        %2046 = vmatprep.subr.mxu0 0.0
        %2047 = vmatpush1.msra.mxu0 0.0
        %2048 = vmatprep.subr.mxu0 0.0
        %2049 = vmatpush1.msra.mxu0 0.0
        %2050 = vmatprep.subr.mxu0 0.0
        %2051 = vmatpush1.msra.mxu0 0.0
        %2052 = vmatprep.subr.mxu0 0.0
        %2053 = vmatpush1.msra.mxu0 0.0
        %2054 = vmatprep.mubr.f32.mxu0 0.0
        %v2055 = vand.u32 %v352, 4294901760
        %2056 = vmatmul.mubr.f32.gmra.mrb[0].mxu0 %v2055
        %v2057 = vpop.f32.mrb[0].mxu0
        %v2058 = vadd.f32 %v1913, %v2057
        %v2059 = vpop.f32.mrb[0].mxu0
        %v2060 = vadd.f32 %v1915, %v2059
        %2061 = vmatprep.mubr.f32.mxu0 0.0
        %v2062 = vand.u32 %v355, 4294901760
        %2063 = vmatmul.mubr.f32.gmra.mrb[0].mxu0 %v2062
        %v2064 = vpop.f32.mrb[0].mxu0
        %v2065 = vadd.f32 %v1924, %v2064
        %v2066 = vpop.f32.mrb[0].mxu0
        %v2067 = vadd.f32 %v1926, %v2066
        %2068 = vmatprep.mubr.f32.mxu0 0.0
        %v2069 = vand.u32 %v358, 4294901760
        %2070 = vmatmul.mubr.f32.gmra.mrb[0].mxu0 %v2069
        %v2071 = vpop.f32.mrb[0].mxu0
        %v2072 = vadd.f32 %v1935, %v2071
        %v2073 = vpop.f32.mrb[0].mxu0
        %v2074 = vadd.f32 %v1937, %v2073
        %2075 = vmatprep.mubr.f32.mxu0 0.0
        %v2076 = vand.u32 %v361, 4294901760
        %2077 = vmatmul.mubr.f32.gmra.mrb[0].mxu0 %v2076
        %v2078 = vpop.f32.mrb[0].mxu0
        %v2079 = vadd.f32 %v1946, %v2078
        %v2080 = vpop.f32.mrb[0].mxu0
        %v2081 = vadd.f32 %v1948, %v2080
        %2082 = vdwg.mxu0
        %v2083 = vand.u32 %v343, 4294901760
        %v2084 = vsub.f32 %v343, %v2083
        %2085 = vmatprep.subr.mxu0 %v2084
        %v2086 = vand.u32 %v342, 4294901760
        %v2087 = vsub.f32 %v342, %v2086
        %2088 = vmatpush1.msra.mxu0 %v2087
        %v2089 = vand.u32 %v345, 4294901760
        %v2090 = vsub.f32 %v345, %v2089
        %2091 = vmatprep.subr.mxu0 %v2090
        %v2092 = vand.u32 %v344, 4294901760
        %v2093 = vsub.f32 %v344, %v2092
        %2094 = vmatpush1.msra.mxu0 %v2093
        %v2095 = vand.u32 %v347, 4294901760
        %v2096 = vsub.f32 %v347, %v2095
        %2097 = vmatprep.subr.mxu0 %v2096
        %v2098 = vand.u32 %v346, 4294901760
        %v2099 = vsub.f32 %v346, %v2098
        %2100 = vmatpush1.msra.mxu0 %v2099
        %v2101 = vand.u32 %v349, 4294901760
        %v2102 = vsub.f32 %v349, %v2101
        %2103 = vmatprep.subr.mxu0 %v2102
        %v2104 = vand.u32 %v348, 4294901760
        %v2105 = vsub.f32 %v348, %v2104
        %2106 = vmatpush1.msra.mxu0 %v2105
        %2107 = vmatprep.subr.mxu0 0.0
        %2108 = vmatpush1.msra.mxu0 0.0
        %2109 = vmatprep.subr.mxu0 0.0
        %2110 = vmatpush1.msra.mxu0 0.0
        %2111 = vmatprep.subr.mxu0 0.0
        %2112 = vmatpush1.msra.mxu0 0.0
        %2113 = vmatprep.subr.mxu0 0.0
        %2114 = vmatpush1.msra.mxu0 0.0
        %2115 = vmatprep.subr.mxu0 0.0
        %2116 = vmatpush1.msra.mxu0 0.0
        %2117 = vmatprep.subr.mxu0 0.0
        %2118 = vmatpush1.msra.mxu0 0.0
        %2119 = vmatprep.subr.mxu0 0.0
        %2120 = vmatpush1.msra.mxu0 0.0
        %2121 = vmatprep.subr.mxu0 0.0
        %2122 = vmatpush1.msra.mxu0 0.0
        %2123 = vmatprep.subr.mxu0 0.0
        %2124 = vmatpush1.msra.mxu0 0.0
        %2125 = vmatprep.subr.mxu0 0.0
        %2126 = vmatpush1.msra.mxu0 0.0
        %2127 = vmatprep.subr.mxu0 0.0
        %2128 = vmatpush1.msra.mxu0 0.0
        %2129 = vmatprep.subr.mxu0 0.0
        %2130 = vmatpush1.msra.mxu0 0.0
        %2131 = vmatprep.subr.mxu0 0.0
        %2132 = vmatpush1.msra.mxu0 0.0
        %2133 = vmatprep.subr.mxu0 0.0
        %2134 = vmatpush1.msra.mxu0 0.0
        %2135 = vmatprep.subr.mxu0 0.0
        %2136 = vmatpush1.msra.mxu0 0.0
        %2137 = vmatprep.subr.mxu0 0.0
        %2138 = vmatpush1.msra.mxu0 0.0
        %2139 = vmatprep.subr.mxu0 0.0
        %2140 = vmatpush1.msra.mxu0 0.0
        %2141 = vmatprep.subr.mxu0 0.0
        %2142 = vmatpush1.msra.mxu0 0.0
        %2143 = vmatprep.subr.mxu0 0.0
        %2144 = vmatpush1.msra.mxu0 0.0
        %2145 = vmatprep.subr.mxu0 0.0
        %2146 = vmatpush1.msra.mxu0 0.0
        %2147 = vmatprep.subr.mxu0 0.0
        %2148 = vmatpush1.msra.mxu0 0.0
        %2149 = vmatprep.subr.mxu0 0.0
        %2150 = vmatpush1.msra.mxu0 0.0
        %2151 = vmatprep.subr.mxu0 0.0
        %2152 = vmatpush1.msra.mxu0 0.0
        %2153 = vmatprep.subr.mxu0 0.0
        %2154 = vmatpush1.msra.mxu0 0.0
        %2155 = vmatprep.subr.mxu0 0.0
        %2156 = vmatpush1.msra.mxu0 0.0
        %2157 = vmatprep.subr.mxu0 0.0
        %2158 = vmatpush1.msra.mxu0 0.0
        %2159 = vmatprep.subr.mxu0 0.0
        %2160 = vmatpush1.msra.mxu0 0.0
        %2161 = vmatprep.subr.mxu0 0.0
        %2162 = vmatpush1.msra.mxu0 0.0
        %2163 = vmatprep.mubr.f32.mxu0 0.0
        %v2164 = vand.u32 %v352, 4294901760
        %v2165 = vsub.f32 %v352, %v2164
        %2166 = vmatmul.mubr.f32.gmra.mrb[0].mxu0 %v2165
        %v2167 = vpop.f32.mrb[0].mxu0
        %v2168 = vadd.f32 %v2058, %v2167
        %v2169 = vpop.f32.mrb[0].mxu0
        %v2170 = vadd.f32 %v2060, %v2169
        %2171 = vmatprep.mubr.f32.mxu0 0.0
        %v2172 = vand.u32 %v355, 4294901760
        %v2173 = vsub.f32 %v355, %v2172
        %2174 = vmatmul.mubr.f32.gmra.mrb[0].mxu0 %v2173
        %v2175 = vpop.f32.mrb[0].mxu0
        %v2176 = vadd.f32 %v2065, %v2175
        %v2177 = vpop.f32.mrb[0].mxu0
        %v2178 = vadd.f32 %v2067, %v2177
        %2179 = vmatprep.mubr.f32.mxu0 0.0
        %v2180 = vand.u32 %v358, 4294901760
        %v2181 = vsub.f32 %v358, %v2180
        %2182 = vmatmul.mubr.f32.gmra.mrb[0].mxu0 %v2181
        %v2183 = vpop.f32.mrb[0].mxu0
        %v2184 = vadd.f32 %v2072, %v2183
        %v2185 = vpop.f32.mrb[0].mxu0
        %v2186 = vadd.f32 %v2074, %v2185
        %2187 = vmatprep.mubr.f32.mxu0 0.0
        %v2188 = vand.u32 %v361, 4294901760
        %v2189 = vsub.f32 %v361, %v2188
        %2190 = vmatmul.mubr.f32.gmra.mrb[0].mxu0 %v2189
        %v2191 = vpop.f32.mrb[0].mxu0
        %v2192 = vadd.f32 %v2079, %v2191
        %v2193 = vpop.f32.mrb[0].mxu0
        %v2194 = vadd.f32 %v2081, %v2193
        %2195 = vdwg.mxu0
        %v2196 = vand.u32 %v343, 4294901760
        %2197 = vmatprep.subr.mxu0 %v2196
        %v2198 = vand.u32 %v342, 4294901760
        %2199 = vmatpush1.msra.mxu0 %v2198
        %v2200 = vand.u32 %v345, 4294901760
        %2201 = vmatprep.subr.mxu0 %v2200
        %v2202 = vand.u32 %v344, 4294901760
        %2203 = vmatpush1.msra.mxu0 %v2202
        %v2204 = vand.u32 %v347, 4294901760
        %2205 = vmatprep.subr.mxu0 %v2204
        %v2206 = vand.u32 %v346, 4294901760
        %2207 = vmatpush1.msra.mxu0 %v2206
        %v2208 = vand.u32 %v349, 4294901760
        %2209 = vmatprep.subr.mxu0 %v2208
        %v2210 = vand.u32 %v348, 4294901760
        %2211 = vmatpush1.msra.mxu0 %v2210
        %2212 = vmatprep.subr.mxu0 0.0
        %2213 = vmatpush1.msra.mxu0 0.0
        %2214 = vmatprep.subr.mxu0 0.0
        %2215 = vmatpush1.msra.mxu0 0.0
        %2216 = vmatprep.subr.mxu0 0.0
        %2217 = vmatpush1.msra.mxu0 0.0
        %2218 = vmatprep.subr.mxu0 0.0
        %2219 = vmatpush1.msra.mxu0 0.0
        %2220 = vmatprep.subr.mxu0 0.0
        %2221 = vmatpush1.msra.mxu0 0.0
        %2222 = vmatprep.subr.mxu0 0.0
        %2223 = vmatpush1.msra.mxu0 0.0
        %2224 = vmatprep.subr.mxu0 0.0
        %2225 = vmatpush1.msra.mxu0 0.0
        %2226 = vmatprep.subr.mxu0 0.0
        %2227 = vmatpush1.msra.mxu0 0.0
        %2228 = vmatprep.subr.mxu0 0.0
        %2229 = vmatpush1.msra.mxu0 0.0
        %2230 = vmatprep.subr.mxu0 0.0
        %2231 = vmatpush1.msra.mxu0 0.0
        %2232 = vmatprep.subr.mxu0 0.0
        %2233 = vmatpush1.msra.mxu0 0.0
        %2234 = vmatprep.subr.mxu0 0.0
        %2235 = vmatpush1.msra.mxu0 0.0
        %2236 = vmatprep.subr.mxu0 0.0
        %2237 = vmatpush1.msra.mxu0 0.0
        %2238 = vmatprep.subr.mxu0 0.0
        %2239 = vmatpush1.msra.mxu0 0.0
        %2240 = vmatprep.subr.mxu0 0.0
        %2241 = vmatpush1.msra.mxu0 0.0
        %2242 = vmatprep.subr.mxu0 0.0
        %2243 = vmatpush1.msra.mxu0 0.0
        %2244 = vmatprep.subr.mxu0 0.0
        %2245 = vmatpush1.msra.mxu0 0.0
        %2246 = vmatprep.subr.mxu0 0.0
        %2247 = vmatpush1.msra.mxu0 0.0
        %2248 = vmatprep.subr.mxu0 0.0
        %2249 = vmatpush1.msra.mxu0 0.0
        %2250 = vmatprep.subr.mxu0 0.0
        %2251 = vmatpush1.msra.mxu0 0.0
        %2252 = vmatprep.subr.mxu0 0.0
        %2253 = vmatpush1.msra.mxu0 0.0
        %2254 = vmatprep.subr.mxu0 0.0
        %2255 = vmatpush1.msra.mxu0 0.0
        %2256 = vmatprep.subr.mxu0 0.0
        %2257 = vmatpush1.msra.mxu0 0.0
        %2258 = vmatprep.subr.mxu0 0.0
        %2259 = vmatpush1.msra.mxu0 0.0
        %2260 = vmatprep.subr.mxu0 0.0
        %2261 = vmatpush1.msra.mxu0 0.0
        %2262 = vmatprep.subr.mxu0 0.0
        %2263 = vmatpush1.msra.mxu0 0.0
        %2264 = vmatprep.subr.mxu0 0.0
        %2265 = vmatpush1.msra.mxu0 0.0
        %2266 = vmatprep.subr.mxu0 0.0
        %2267 = vmatpush1.msra.mxu0 0.0
        %2268 = vmatprep.mubr.f32.mxu0 0.0
        %v2269 = vand.u32 %v352, 4294901760
        %v2270 = vsub.f32 %v352, %v2269
        %v2271 = vand.u32 %v2270, 4294901760
        %2272 = vmatmul.mubr.f32.gmra.mrb[0].mxu0 %v2271
        %v2273 = vpop.f32.mrb[0].mxu0
        %v2274 = vadd.f32 %v2168, %v2273
        %v2275 = vpop.f32.mrb[0].mxu0
        %v2276 = vadd.f32 %v2170, %v2275
        %2277 = vmatprep.mubr.f32.mxu0 0.0
        %v2278 = vand.u32 %v355, 4294901760
        %v2279 = vsub.f32 %v355, %v2278
        %v2280 = vand.u32 %v2279, 4294901760
        %2281 = vmatmul.mubr.f32.gmra.mrb[0].mxu0 %v2280
        %v2282 = vpop.f32.mrb[0].mxu0
        %v2283 = vadd.f32 %v2176, %v2282
        %v2284 = vpop.f32.mrb[0].mxu0
        %v2285 = vadd.f32 %v2178, %v2284
        %2286 = vmatprep.mubr.f32.mxu0 0.0
        %v2287 = vand.u32 %v358, 4294901760
        %v2288 = vsub.f32 %v358, %v2287
        %v2289 = vand.u32 %v2288, 4294901760
        %2290 = vmatmul.mubr.f32.gmra.mrb[0].mxu0 %v2289
        %v2291 = vpop.f32.mrb[0].mxu0
        %v2292 = vadd.f32 %v2184, %v2291
        %v2293 = vpop.f32.mrb[0].mxu0
        %v2294 = vadd.f32 %v2186, %v2293
        %2295 = vmatprep.mubr.f32.mxu0 0.0
        %v2296 = vand.u32 %v361, 4294901760
        %v2297 = vsub.f32 %v361, %v2296
        %v2298 = vand.u32 %v2297, 4294901760
        %2299 = vmatmul.mubr.f32.gmra.mrb[0].mxu0 %v2298
        %v2300 = vpop.f32.mrb[0].mxu0
        %v2301 = vadd.f32 %v2192, %v2300
        %v2302 = vpop.f32.mrb[0].mxu0
        %v2303 = vadd.f32 %v2194, %v2302
        %2304 = vdwg.mxu0
        %v2305 = vand.u32 %v343, 4294901760
        %v2306 = vsub.f32 %v343, %v2305
        %v2307 = vand.u32 %v2306, 4294901760
        %2308 = vmatprep.subr.mxu0 %v2307
        %v2309 = vand.u32 %v342, 4294901760
        %v2310 = vsub.f32 %v342, %v2309
        %v2311 = vand.u32 %v2310, 4294901760
        %2312 = vmatpush1.msra.mxu0 %v2311
        %v2313 = vand.u32 %v345, 4294901760
        %v2314 = vsub.f32 %v345, %v2313
        %v2315 = vand.u32 %v2314, 4294901760
        %2316 = vmatprep.subr.mxu0 %v2315
        %v2317 = vand.u32 %v344, 4294901760
        %v2318 = vsub.f32 %v344, %v2317
        %v2319 = vand.u32 %v2318, 4294901760
        %2320 = vmatpush1.msra.mxu0 %v2319
        %v2321 = vand.u32 %v347, 4294901760
        %v2322 = vsub.f32 %v347, %v2321
        %v2323 = vand.u32 %v2322, 4294901760
        %2324 = vmatprep.subr.mxu0 %v2323
        %v2325 = vand.u32 %v346, 4294901760
        %v2326 = vsub.f32 %v346, %v2325
        %v2327 = vand.u32 %v2326, 4294901760
        %2328 = vmatpush1.msra.mxu0 %v2327
        %v2329 = vand.u32 %v349, 4294901760
        %v2330 = vsub.f32 %v349, %v2329
        %v2331 = vand.u32 %v2330, 4294901760
        %2332 = vmatprep.subr.mxu0 %v2331
        %v2333 = vand.u32 %v348, 4294901760
        %v2334 = vsub.f32 %v348, %v2333
        %v2335 = vand.u32 %v2334, 4294901760
        %2336 = vmatpush1.msra.mxu0 %v2335
        %2337 = vmatprep.subr.mxu0 0.0
        %2338 = vmatpush1.msra.mxu0 0.0
        %2339 = vmatprep.subr.mxu0 0.0
        %2340 = vmatpush1.msra.mxu0 0.0
        %2341 = vmatprep.subr.mxu0 0.0
        %2342 = vmatpush1.msra.mxu0 0.0
        %2343 = vmatprep.subr.mxu0 0.0
        %2344 = vmatpush1.msra.mxu0 0.0
        %2345 = vmatprep.subr.mxu0 0.0
        %2346 = vmatpush1.msra.mxu0 0.0
        %2347 = vmatprep.subr.mxu0 0.0
        %2348 = vmatpush1.msra.mxu0 0.0
        %2349 = vmatprep.subr.mxu0 0.0
        %2350 = vmatpush1.msra.mxu0 0.0
        %2351 = vmatprep.subr.mxu0 0.0
        %2352 = vmatpush1.msra.mxu0 0.0
        %2353 = vmatprep.subr.mxu0 0.0
        %2354 = vmatpush1.msra.mxu0 0.0
        %2355 = vmatprep.subr.mxu0 0.0
        %2356 = vmatpush1.msra.mxu0 0.0
        %2357 = vmatprep.subr.mxu0 0.0
        %2358 = vmatpush1.msra.mxu0 0.0
        %2359 = vmatprep.subr.mxu0 0.0
        %2360 = vmatpush1.msra.mxu0 0.0
        %2361 = vmatprep.subr.mxu0 0.0
        %2362 = vmatpush1.msra.mxu0 0.0
        %2363 = vmatprep.subr.mxu0 0.0
        %2364 = vmatpush1.msra.mxu0 0.0
        %2365 = vmatprep.subr.mxu0 0.0
        %2366 = vmatpush1.msra.mxu0 0.0
        %2367 = vmatprep.subr.mxu0 0.0
        %2368 = vmatpush1.msra.mxu0 0.0
        %2369 = vmatprep.subr.mxu0 0.0
        %2370 = vmatpush1.msra.mxu0 0.0
        %2371 = vmatprep.subr.mxu0 0.0
        %2372 = vmatpush1.msra.mxu0 0.0
        %2373 = vmatprep.subr.mxu0 0.0
        %2374 = vmatpush1.msra.mxu0 0.0
        %2375 = vmatprep.subr.mxu0 0.0
        %2376 = vmatpush1.msra.mxu0 0.0
        %2377 = vmatprep.subr.mxu0 0.0
        %2378 = vmatpush1.msra.mxu0 0.0
        %2379 = vmatprep.subr.mxu0 0.0
        %2380 = vmatpush1.msra.mxu0 0.0
        %2381 = vmatprep.subr.mxu0 0.0
        %2382 = vmatpush1.msra.mxu0 0.0
        %2383 = vmatprep.subr.mxu0 0.0
        %2384 = vmatpush1.msra.mxu0 0.0
        %2385 = vmatprep.subr.mxu0 0.0
        %2386 = vmatpush1.msra.mxu0 0.0
        %2387 = vmatprep.subr.mxu0 0.0
        %2388 = vmatpush1.msra.mxu0 0.0
        %2389 = vmatprep.subr.mxu0 0.0
        %2390 = vmatpush1.msra.mxu0 0.0
        %2391 = vmatprep.subr.mxu0 0.0
        %2392 = vmatpush1.msra.mxu0 0.0
        %2393 = vmatprep.mubr.f32.mxu0 0.0
        %v2394 = vand.u32 %v352, 4294901760
        %2395 = vmatmul.mubr.f32.gmra.mrb[0].mxu0 %v2394
        %v2396 = vpop.f32.mrb[0].mxu0
        %v2397 = vadd.f32 %v2274, %v2396
        %v2398 = vpop.f32.mrb[0].mxu0
        %v2399 = vadd.f32 %v2276, %v2398
        %2400 = vmatprep.mubr.f32.mxu0 0.0
        %v2401 = vand.u32 %v355, 4294901760
        %2402 = vmatmul.mubr.f32.gmra.mrb[0].mxu0 %v2401
        %v2403 = vpop.f32.mrb[0].mxu0
        %v2404 = vadd.f32 %v2283, %v2403
        %v2405 = vpop.f32.mrb[0].mxu0
        %v2406 = vadd.f32 %v2285, %v2405
        %2407 = vmatprep.mubr.f32.mxu0 0.0
        %v2408 = vand.u32 %v358, 4294901760
        %2409 = vmatmul.mubr.f32.gmra.mrb[0].mxu0 %v2408
        %v2410 = vpop.f32.mrb[0].mxu0
        %v2411 = vadd.f32 %v2292, %v2410
        %v2412 = vpop.f32.mrb[0].mxu0
        %v2413 = vadd.f32 %v2294, %v2412
        %2414 = vmatprep.mubr.f32.mxu0 0.0
        %v2415 = vand.u32 %v361, 4294901760
        %2416 = vmatmul.mubr.f32.gmra.mrb[0].mxu0 %v2415
        %v2417 = vpop.f32.mrb[0].mxu0
        %v2418 = vadd.f32 %v2301, %v2417
        %v2419 = vpop.f32.mrb[0].mxu0
        %v2420 = vadd.f32 %v2303, %v2419
        %2421 = vdwg.mxu0
        %v2422 = vand.u32 %v343, 4294901760
        %2423 = vmatprep.subr.mxu0 %v2422
        %v2424 = vand.u32 %v342, 4294901760
        %2425 = vmatpush1.msra.mxu0 %v2424
        %v2426 = vand.u32 %v345, 4294901760
        %2427 = vmatprep.subr.mxu0 %v2426
        %v2428 = vand.u32 %v344, 4294901760
        %2429 = vmatpush1.msra.mxu0 %v2428
        %v2430 = vand.u32 %v347, 4294901760
        %2431 = vmatprep.subr.mxu0 %v2430
        %v2432 = vand.u32 %v346, 4294901760
        %2433 = vmatpush1.msra.mxu0 %v2432
        %v2434 = vand.u32 %v349, 4294901760
        %2435 = vmatprep.subr.mxu0 %v2434
        %v2436 = vand.u32 %v348, 4294901760
        %2437 = vmatpush1.msra.mxu0 %v2436
        %2438 = vmatprep.subr.mxu0 0.0
        %2439 = vmatpush1.msra.mxu0 0.0
        %2440 = vmatprep.subr.mxu0 0.0
        %2441 = vmatpush1.msra.mxu0 0.0
        %2442 = vmatprep.subr.mxu0 0.0
        %2443 = vmatpush1.msra.mxu0 0.0
        %2444 = vmatprep.subr.mxu0 0.0
        %2445 = vmatpush1.msra.mxu0 0.0
        %2446 = vmatprep.subr.mxu0 0.0
        %2447 = vmatpush1.msra.mxu0 0.0
        %2448 = vmatprep.subr.mxu0 0.0
        %2449 = vmatpush1.msra.mxu0 0.0
        %2450 = vmatprep.subr.mxu0 0.0
        %2451 = vmatpush1.msra.mxu0 0.0
        %2452 = vmatprep.subr.mxu0 0.0
        %2453 = vmatpush1.msra.mxu0 0.0
        %2454 = vmatprep.subr.mxu0 0.0
        %2455 = vmatpush1.msra.mxu0 0.0
        %2456 = vmatprep.subr.mxu0 0.0
        %2457 = vmatpush1.msra.mxu0 0.0
        %2458 = vmatprep.subr.mxu0 0.0
        %2459 = vmatpush1.msra.mxu0 0.0
        %2460 = vmatprep.subr.mxu0 0.0
        %2461 = vmatpush1.msra.mxu0 0.0
        %2462 = vmatprep.subr.mxu0 0.0
        %2463 = vmatpush1.msra.mxu0 0.0
        %2464 = vmatprep.subr.mxu0 0.0
        %2465 = vmatpush1.msra.mxu0 0.0
        %2466 = vmatprep.subr.mxu0 0.0
        %2467 = vmatpush1.msra.mxu0 0.0
        %2468 = vmatprep.subr.mxu0 0.0
        %2469 = vmatpush1.msra.mxu0 0.0
        %2470 = vmatprep.subr.mxu0 0.0
        %2471 = vmatpush1.msra.mxu0 0.0
        %2472 = vmatprep.subr.mxu0 0.0
        %2473 = vmatpush1.msra.mxu0 0.0
        %2474 = vmatprep.subr.mxu0 0.0
        %2475 = vmatpush1.msra.mxu0 0.0
        %2476 = vmatprep.subr.mxu0 0.0
        %2477 = vmatpush1.msra.mxu0 0.0
        %2478 = vmatprep.subr.mxu0 0.0
        %2479 = vmatpush1.msra.mxu0 0.0
        %2480 = vmatprep.subr.mxu0 0.0
        %2481 = vmatpush1.msra.mxu0 0.0
        %2482 = vmatprep.subr.mxu0 0.0
        %2483 = vmatpush1.msra.mxu0 0.0
        %2484 = vmatprep.subr.mxu0 0.0
        %2485 = vmatpush1.msra.mxu0 0.0
        %2486 = vmatprep.subr.mxu0 0.0
        %2487 = vmatpush1.msra.mxu0 0.0
        %2488 = vmatprep.subr.mxu0 0.0
        %2489 = vmatpush1.msra.mxu0 0.0
        %2490 = vmatprep.subr.mxu0 0.0
        %2491 = vmatpush1.msra.mxu0 0.0
        %2492 = vmatprep.subr.mxu0 0.0
        %2493 = vmatpush1.msra.mxu0 0.0
        %2494 = vmatprep.mubr.f32.mxu0 0.0
        %v2495 = vand.u32 %v352, 4294901760
        %2496 = vmatmul.mubr.f32.gmra.mrb[0].mxu0 %v2495
        %v2497 = vpop.f32.mrb[0].mxu0
        %v2498 = vadd.f32 %v2397, %v2497
        %v2499 = vpop.f32.mrb[0].mxu0
        %v2500 = vadd.f32 %v2399, %v2499
        %2501 = vmatprep.mubr.f32.mxu0 0.0
        %v2502 = vand.u32 %v355, 4294901760
        %2503 = vmatmul.mubr.f32.gmra.mrb[0].mxu0 %v2502
        %v2504 = vpop.f32.mrb[0].mxu0
        %v2505 = vadd.f32 %v2404, %v2504
        %v2506 = vpop.f32.mrb[0].mxu0
        %v2507 = vadd.f32 %v2406, %v2506
        %2508 = vmatprep.mubr.f32.mxu0 0.0
        %v2509 = vand.u32 %v358, 4294901760
        %2510 = vmatmul.mubr.f32.gmra.mrb[0].mxu0 %v2509
        %v2511 = vpop.f32.mrb[0].mxu0
        %v2512 = vadd.f32 %v2411, %v2511
        %v2513 = vpop.f32.mrb[0].mxu0
        %v2514 = vadd.f32 %v2413, %v2513
        %2515 = vmatprep.mubr.f32.mxu0 0.0
        %v2516 = vand.u32 %v361, 4294901760
        %2517 = vmatmul.mubr.f32.gmra.mrb[0].mxu0 %v2516
        %v2518 = vpop.f32.mrb[0].mxu0
        %v2519 = vadd.f32 %v2418, %v2518
        %v2520 = vpop.f32.mrb[0].mxu0
        %v2521 = vadd.f32 %v2420, %v2520
        %2522 = vdwg.mxu0
        %v2523 = vld [vmem:[%s235] sm:$0xff]
        %v2524 = vld [vmem:[%s235 + $0x8] sm:$0xff]
        %v2525 = vld [vmem:[%s235 + $0x10] sm:$0xff]
        %v2526 = vld [vmem:[%s235 + $0x18] sm:$0xff]
        %v2527 = vld [vmem:[%s235 + $0x20] sm:$0xff]
        %v2528 = vld [vmem:[%s235 + $0x28] sm:$0xff]
        %v2529 = vld [vmem:[%s235 + $0x30] sm:$0xff]
        %v2530 = vld [vmem:[%s235 + $0x38] sm:$0xff]
        %v2531 = vadd.f32 %v2523, %v2498
        %v2532 = vadd.f32 %v2524, %v2500
        %v2533 = vadd.f32 %v2525, %v2505
        %v2534 = vadd.f32 %v2526, %v2507
        %v2535 = vadd.f32 %v2527, %v2512
        %v2536 = vadd.f32 %v2528, %v2514
        %v2537 = vadd.f32 %v2529, %v2519
        %v2538 = vadd.f32 %v2530, %v2521
        %2539 = vst [vmem:[%s262] sm:$0xff] %v2531
        %2540 = vst [vmem:[%s262 + $0x8] sm:$0xff] %v2532
        %2541 = vst [vmem:[%s262 + $0x10] sm:$0xff] %v2533
        %2542 = vst [vmem:[%s262 + $0x18] sm:$0xff] %v2534
        %2543 = vst [vmem:[%s262 + $0x20] sm:$0xff] %v2535
        %2544 = vst [vmem:[%s262 + $0x28] sm:$0xff] %v2536
        %2545 = vst [vmem:[%s262 + $0x30] sm:$0xff] %v2537
        %2546 = vst [vmem:[%s262 + $0x38] sm:$0xff] %v2538
        %s2547 = sand.u32 %s120, 1
        %s2548 = scalar_lea.sflag [#allocation4], %s2547
        %s2549 = sand.u32 %s120, 1
        %s2550 = smul.addr %s2549, 64
        %s2551 = scalar_lea.vmem [#allocation8], %s2550
        // Predicated region
        $region45: #{tpu_custom_call.1} parent=31 // pred_check
          %p2552 = pneg %p130
        $region46: #{tpu_custom_call.1} parent=31 // pred_check_branch
          %2554 = sbr.rel (%p2552) target = $region48
        $region47: #{tpu_custom_call.1} parent=31 // pred_region
          %s2555 = smul.u32 2, %s26
          %s2557 = ssub.s32 1024, 1024
          %2558 = vsyncadd %s2548, %s2557
          %s2559 = smul.addr %s25, 8
          %s2560 = sadd.s32 %s2555, %s2559
          %s2561 = smul.addr %s2560, 128
          %s2562 = scalar_lea.hbm %s3, %s2561
          %s2563 = sshll.u32 %s2551, 4
          %s2564 = int_to_ptr.vmem [resolvable:$true] %s2563
          %2569 = dma.vmem_to_hbm [thread:$0]  %s2564, 1024, %s2562, %s2548, 256, 256, 16
        $region48: #{tpu_custom_call.1} parent=31 // pred_fallthru
          _
      $region32: #{tpu_custom_call.1} parent=5 // pred_fallthru
        _
      %p2570 = scmp.le.s32.totalorder 2, %s16
      // Predicated region
      $region49: #{tpu_custom_call.1} parent=5 // pred_check
        %p2571 = pneg %p2570
      $region50: #{tpu_custom_call.1} parent=5 // pred_check_branch
        %2573 = sbr.rel (%p2571) target = $region52
      $region51: #{tpu_custom_call.1} parent=5 // pred_region
        %s2574 = ssub.s32 %s16, 2
        // Predicated region
        $region53: #{tpu_custom_call.1} parent=51 // pred_check
          %p2575 = pneg %p136
        $region54: #{tpu_custom_call.1} parent=51 // pred_check_branch
          %2577 = sbr.rel (%p2575) target = $region56
        $region55: #{tpu_custom_call.1} parent=51 // pred_region
          %s2578 = sand.u32 %s121, 1
          %s2579 = scalar_lea.sflag [#allocation4], %s2578
          %s2580 = sand.u32 %s121, 1
          %s2581 = smul.addr %s2580, 64
          %s2582 = scalar_lea.vmem [#allocation8], %s2581
          %2583 = dma.done %s2579, 1024
        $region56: #{tpu_custom_call.1} parent=51 // pred_fallthru
          _
      $region52: #{tpu_custom_call.1} parent=5 // pred_fallthru
        _
    $region6: #{tpu_custom_call.1} parent=1 // loop_footer
      %s20 = sadd.s32 1, %s16
    $region7: #{tpu_custom_call.1} parent=1 // loop_footer_branch
      %15 = sbr.rel target = $region3
    $region8: #{tpu_custom_call.1} parent=1 // loop_exit
      _
    %2584 = vsyncpa [#allocation3], 1
    %s2585 = scalar_lea.sflag [#allocation3], 1
    %2586 = vsyncpa %s2585, 1
    %2587 = vsyncpa [#allocation6], 1
    %s2588 = scalar_lea.sflag [#allocation6], 1
    %2589 = vsyncpa %s2588, 1
    %2590 = vsyncpa [#allocation4], 1
    %s2591 = scalar_lea.sflag [#allocation4], 1
    %2592 = vsyncpa %s2591, 1

</llo_original>
